<compile_context>
chip_gen: v7x
topology: tpu7x:2x2x1
jax: 0.10.0
libtpu: 0.0.40
codegen_flags: <defaults>
</compile_context>

<pallas_src>
import functools

import numpy as np
import jax
import jax.numpy as jnp
from jax.experimental import pallas as pl
from jax.experimental.pallas import tpu as pltpu


def _round_up(x, m):
    return (x + m - 1) // m * m


# Row indices inside the packed (24, F) vector slab.
_W1R0, _W1R1 = 0, 1
_B1, _G1, _BE1 = 2, 3, 4
_B2, _G2, _BE2 = 5, 6, 7
_B3, _G3, _BE3 = 8, 9, 10
_B4 = 11                    # b4 broadcast across the row
_W4 = 16                    # rows 16..23: row 16 = w4, rows 17..23 = 0 (8-row aligned)
_NVEC = 24


# ---------------- Pallas kernel: fused 4-layer MLP (per row-tile) -----------
def _dpb_kernel(x_ref, mats_ref, vecs_ref, o_ref, *, dim, eps, mm_dtype):
    inv_dim = 1.0 / dim
    R = o_ref.shape[0]                       # number of 128-row groups in this tile

    def row(idx):
        return vecs_ref[idx:idx + 1, :]      # (1, F)

    def layer_norm_relu(h, g, be):
        # Padded lanes of h are exactly 0, so plain lane sums give stats over `dim`.
        mean = jnp.sum(h, axis=-1, keepdims=True) * inv_dim
        var = jnp.sum(h * h, axis=-1, keepdims=True) * inv_dim - mean * mean
        var = jnp.maximum(var, 0.0)
        h = (h - mean) * jax.lax.rsqrt(var + eps)
        # gamma/beta are zero-padded -> padded lanes return to exactly 0.
        return jnp.maximum(h * g + be, 0.0)

    # ---- Layer 1: Linear(2, dim) on the VPU (input stays 2 lanes wide). ----
    x = x_ref[...]                                            # (tm, 2) f32
    h = x[:, 0:1] * row(_W1R0) + x[:, 1:2] * row(_W1R1) + row(_B1)
    h = layer_norm_relu(h, row(_G1), row(_BE1))

    # ---- Layers 2, 3: Linear(dim, dim) on the MXU (bf16 in, f32 accumulate). ----
    for layer, (b_i, g_i, be_i) in enumerate(((_B2, _G2, _BE2), (_B3, _G3, _BE3))):
        h = jnp.dot(h.astype(mm_dtype), mats_ref[layer],
                    preferred_element_type=jnp.float32) + row(b_i)
        h = layer_norm_relu(h, row(g_i), row(be_i))

    # ---- Layer 4: Linear(dim, 1), emitted lane-dense. ----
    # For each 128-row group, contract the feature dim against an 8-row weight
    # block (row 0 = w4, rows 1..7 = 0) so the 128 row-results land on lanes.
    w4_8 = vecs_ref[_W4:_W4 + 8, :]                           # (8, F)
    b4 = vecs_ref[_B4:_B4 + 1, 0:1]                           # (1, 1)
    for r in range(R):
        hg = h[r * 128:(r + 1) * 128, :]                      # (128, F)
        outg = jax.lax.dot_general(w4_8, hg, (((1,), (1,)), ((), ())),
                                   preferred_element_type=jnp.float32)   # (8, 128)
        o_ref[r:r + 1, :] = outg[0:1, :] + b4


# ---------------- Wrapper ----------------------------------------------------
def dynamic_position_bias_forward(x, params, dim, *, eps=1e-5,
                                  matmul_dtype=jnp.bfloat16):
    """x: (..., 2) float array of relative positions -> (...) bias values."""
    lead = x.shape[:-1]
    assert x.shape[-1] == 2, "DynamicPositionBias expects (..., 2) inputs"
    M = max(int(np.prod(lead)) if lead else 1, 1)
    F = _round_up(dim, 128)                  # lane-padded feature width

    # Row tiling: the lane-dense output block (tm//128, 128) must either equal
    # the full output array (single grid step) or have a sublane dim that is a
    # multiple of 8 (tm = 1024).  Small/medium M -> one step; large M -> 1024-row
    # tiles the two v7x TensorCores can split (grid axis is "parallel").
    Mp = _round_up(M, 128)
    if Mp <= 1024:
        tm = Mp
    else:
        tm = 1024
        Mp = _round_up(M, tm)
    grid = (Mp // tm,)

    x2 = jnp.asarray(x, jnp.float32).reshape(M, 2)
    x_rows = jnp.pad(x2, ((0, Mp - M), (0, 0)))               # row pad only (8 B/row)

    (w1, b1, g1, be1), (w2, b2, g2, be2), (w3, b3, g3, be3), (w4, b4) = params

    def pad_mat(w):
        w = jnp.asarray(w, jnp.float32)
        return jnp.pad(w, ((0, F - w.shape[0]), (0, F - w.shape[1])))

    def pad_row(v):
        v = jnp.asarray(v, jnp.float32).reshape(-1)
        return jnp.pad(v, (0, F - v.shape[0]))

    zero_row = jnp.zeros((F,), jnp.float32)
    w1f = jnp.asarray(w1, jnp.float32)
    rows = [pad_row(w1f[0]), pad_row(w1f[1]),
            pad_row(b1), pad_row(g1), pad_row(be1),
            pad_row(b2), pad_row(g2), pad_row(be2),
            pad_row(b3), pad_row(g3), pad_row(be3),
            jnp.full((F,), jnp.asarray(b4, jnp.float32).reshape(()), jnp.float32),
            zero_row, zero_row, zero_row, zero_row,
            pad_row(jnp.asarray(w4, jnp.float32)[:, 0]),
            zero_row, zero_row, zero_row, zero_row, zero_row, zero_row, zero_row]
    vecs = jnp.stack(rows)                                            # (24, F) f32
    mats = jnp.stack([pad_mat(w2), pad_mat(w3)]).astype(matmul_dtype)  # (2, F, F)

    mm_bytes = 2 * F * F * jnp.dtype(matmul_dtype).itemsize
    cost = pl.CostEstimate(
        flops=Mp * (4 * F * F + 64 * F),
        transcendentals=3 * Mp,
        bytes_accessed=Mp * 8 + Mp * 4 + mm_bytes + _NVEC * F * 4)

    out = pl.pallas_call(
        functools.partial(_dpb_kernel, dim=dim, eps=eps, mm_dtype=matmul_dtype),
        out_shape=jax.ShapeDtypeStruct((Mp // 128, 128), jnp.float32),
        grid=grid,
        in_specs=[
            pl.BlockSpec((tm, 2), lambda i: (i, 0)),          # x row tile, 2 lanes wide
            pl.BlockSpec((2, F, F), lambda i: (0, 0, 0)),     # VMEM-resident w2/w3
            pl.BlockSpec((_NVEC, F), lambda i: (0, 0)),       # packed w1/bias/LN/w4 slab
        ],
        out_specs=pl.BlockSpec((tm // 128, 128), lambda i: (i, 0)),   # lane-dense bias
        compiler_params=pltpu.CompilerParams(
            dimension_semantics=("parallel",)),
        cost_estimate=cost,
    )(x_rows, mats, vecs)

    # out[s, l] is the bias of flattened row s*128 + l.
    return out.reshape(-1)[:M].reshape(lead)


# ---------------- Parameter init (mirrors PyTorch defaults) ------------------
def init_dynamic_position_bias_params(key, dim):
    def linear_init(k, fan_in, fan_out):
        kw, kb = jax.random.split(k)
        bound = 1.0 / np.sqrt(fan_in)
        w = jax.random.uniform(kw, (fan_in, fan_out), jnp.float32, -bound, bound)
        b = jax.random.uniform(kb, (fan_out,), jnp.float32, -bound, bound)
        return w, b

    k1, k2, k3, k4 = jax.random.split(key, 4)
    w1, b1 = linear_init(k1, 2, dim)
    w2, b2 = linear_init(k2, dim, dim)
    w3, b3 = linear_init(k3, dim, dim)
    w4, b4 = linear_init(k4, dim, 1)
    ones = jnp.ones((dim,), jnp.float32)
    zeros = jnp.zeros((dim,), jnp.float32)
    return ((w1, b1, ones, zeros),
            (w2, b2, ones, zeros),
            (w3, b3, ones, zeros),
            (w4, b4))


# ---------------- Pure-JAX reference for correctness -------------------------
def _reference_forward(x, params, eps=1e-5, matmul_dtype=jnp.float32):
    (w1, b1, g1, be1), (w2, b2, g2, be2), (w3, b3, g3, be3), (w4, b4) = params

    def ln(h, g, b):
        mu = jnp.mean(h, axis=-1, keepdims=True)
        var = jnp.mean((h - mu) ** 2, axis=-1, keepdims=True)
        return (h - mu) / jnp.sqrt(var + eps) * g + b

    h = jnp.asarray(x, jnp.float32)
    h = jnp.maximum(ln(h @ jnp.asarray(w1, jnp.float32) + b1, g1, be1), 0.0)
    for (w, b, g, be) in ((w2, b2, g2, be2), (w3, b3, g3, be3)):
        hw = jnp.dot(h.astype(matmul_dtype), jnp.asarray(w, matmul_dtype),
                     preferred_element_type=jnp.float32)
        h = jnp.maximum(ln(hw + b, g, be), 0.0)
    return (h @ jnp.asarray(w4, jnp.float32) + jnp.asarray(b4, jnp.float32))[..., 0]


if __name__ == "__main__":
    key = jax.random.PRNGKey(0)
    dim = 32
    window = 8  # relative-position grid: (2*window-1)^2 = 225 coordinate pairs

    params = init_dynamic_position_bias_params(key, dim)

    r = jnp.arange(-(window - 1), window, dtype=jnp.float32)
    pos = jnp.stack(jnp.meshgrid(r, r, indexing="ij"), axis=-1).reshape(-1, 2)  # (225, 2)

    # Exact-path check: f32 matmuls vs f32 reference.
    out_f32 = jax.block_until_ready(
        dynamic_position_bias_forward(pos, params, dim, matmul_dtype=jnp.float32))
    ref_f32 = jax.block_until_ready(_reference_forward(pos, params))
    assert out_f32.shape == ref_f32.shape == (pos.shape[0],), (out_f32.shape, ref_f32.shape)
    np.testing.assert_allclose(np.asarray(out_f32), np.asarray(ref_f32),
                               atol=1e-3, rtol=1e-3)

    # Default bf16 matmul path (MXU-native on v6e/v7x) vs a bf16-cast reference.
    out_bf16 = jax.block_until_ready(
        dynamic_position_bias_forward(pos, params, dim))
    ref_bf16 = jax.block_until_ready(
        _reference_forward(pos, params, matmul_dtype=jnp.bfloat16))
    np.testing.assert_allclose(np.asarray(out_bf16), np.asarray(ref_bf16),
                               atol=1e-2, rtol=1e-2)

    print("KERNEL_OK")
</pallas_src>

<mosaic_0001>
module attributes {stable_mosaic.version = 11 : i64} {
  func.func @_dpb_kernel(%arg0: i32, %arg1: memref<256x2xf32, #tpu.memory_space<vmem>>, %arg2: memref<2x128x128xf32, #tpu.memory_space<vmem>>, %arg3: memref<24x128xf32, #tpu.memory_space<vmem>>, %arg4: memref<2x128xf32, #tpu.memory_space<vmem>>) attributes {dimension_semantics = [#tpu.dimension_semantics<parallel>], iteration_bounds = array<i64: 1>, scalar_prefetch = 0 : i64, scratch_operands = 0 : i64, tpu.core_type = #tpu.core_type<tc>, window_params = [{transform_indices = @transform_0, window_bounds = array<i64: 256, 2>}, {pipeline_mode = #tpu.pipeline_mode<synchronous>, transform_indices = @transform_1, window_bounds = array<i64: 2, 128, 128>}, {pipeline_mode = #tpu.pipeline_mode<synchronous>, transform_indices = @transform_2, window_bounds = array<i64: 24, 128>}, {transform_indices = @transform_3, window_bounds = array<i64: 2, 128>}]} {
    %c0 = arith.constant 0 : index
    %c0_0 = arith.constant 0 : index
    %0 = vector.load %arg1[%c0, %c0_0] : memref<256x2xf32, #tpu.memory_space<vmem>>, vector<256x2xf32>
    %1 = vector.extract_strided_slice %0 {offsets = [0, 0], sizes = [256, 1], strides = [1, 1]} : vector<256x2xf32> to vector<256x1xf32>
    %c0_1 = arith.constant 0 : index
    %c0_2 = arith.constant 0 : index
    %2 = vector.load %arg3[%c0_1, %c0_2] : memref<24x128xf32, #tpu.memory_space<vmem>>, vector<1x128xf32>
    %3 = vector.broadcast %1 : vector<256x1xf32> to vector<256x128xf32>
    %4 = vector.broadcast %2 : vector<1x128xf32> to vector<256x128xf32>
    %5 = arith.mulf %3, %4 : vector<256x128xf32>
    %6 = vector.extract_strided_slice %0 {offsets = [0, 1], sizes = [256, 1], strides = [1, 1]} : vector<256x2xf32> to vector<256x1xf32>
    %c1 = arith.constant 1 : index
    %c0_3 = arith.constant 0 : index
    %7 = vector.load %arg3[%c1, %c0_3] : memref<24x128xf32, #tpu.memory_space<vmem>>, vector<1x128xf32>
    %8 = vector.broadcast %6 : vector<256x1xf32> to vector<256x128xf32>
    %9 = vector.broadcast %7 : vector<1x128xf32> to vector<256x128xf32>
    %10 = arith.mulf %8, %9 : vector<256x128xf32>
    %11 = arith.addf %5, %10 : vector<256x128xf32>
    %c2 = arith.constant 2 : index
    %c0_4 = arith.constant 0 : index
    %12 = vector.load %arg3[%c2, %c0_4] : memref<24x128xf32, #tpu.memory_space<vmem>>, vector<1x128xf32>
    %13 = vector.broadcast %12 : vector<1x128xf32> to vector<256x128xf32>
    %14 = arith.addf %11, %13 : vector<256x128xf32>
    %c3 = arith.constant 3 : index
    %c0_5 = arith.constant 0 : index
    %15 = vector.load %arg3[%c3, %c0_5] : memref<24x128xf32, #tpu.memory_space<vmem>>, vector<1x128xf32>
    %c4 = arith.constant 4 : index
    %c0_6 = arith.constant 0 : index
    %16 = vector.load %arg3[%c4, %c0_6] : memref<24x128xf32, #tpu.memory_space<vmem>>, vector<1x128xf32>
    %cst = arith.constant dense<0.000000e+00> : vector<256xf32>
    %17 = vector.multi_reduction <add>, %14, %cst [1] : vector<256x128xf32> to vector<256xf32>
    %18 = vector.shape_cast %17 : vector<256xf32> to vector<256x1xf32>
    %cst_7 = arith.constant 3.125000e-02 : f32
    %19 = vector.broadcast %cst_7 : f32 to vector<256x1xf32>
    %20 = arith.mulf %18, %19 : vector<256x1xf32>
    %21 = arith.mulf %14, %14 : vector<256x128xf32>
    %cst_8 = arith.constant dense<0.000000e+00> : vector<256xf32>
    %22 = vector.multi_reduction <add>, %21, %cst_8 [1] : vector<256x128xf32> to vector<256xf32>
    %23 = vector.shape_cast %22 : vector<256xf32> to vector<256x1xf32>
    %cst_9 = arith.constant 3.125000e-02 : f32
    %24 = vector.broadcast %cst_9 : f32 to vector<256x1xf32>
    %25 = arith.mulf %23, %24 : vector<256x1xf32>
    %26 = arith.mulf %20, %20 : vector<256x1xf32>
    %27 = arith.subf %25, %26 : vector<256x1xf32>
    %cst_10 = arith.constant 0.000000e+00 : f32
    %28 = vector.broadcast %cst_10 : f32 to vector<256x1xf32>
    %29 = arith.maximumf %27, %28 : vector<256x1xf32>
    %30 = vector.broadcast %20 : vector<256x1xf32> to vector<256x128xf32>
    %31 = arith.subf %14, %30 : vector<256x128xf32>
    %cst_11 = arith.constant 9.99999974E-6 : f32
    %32 = vector.broadcast %cst_11 : f32 to vector<256x1xf32>
    %33 = arith.addf %29, %32 : vector<256x1xf32>
    %34 = math.rsqrt %33 : vector<256x1xf32>
    %35 = vector.broadcast %34 : vector<256x1xf32> to vector<256x128xf32>
    %36 = arith.mulf %31, %35 : vector<256x128xf32>
    %37 = vector.broadcast %15 : vector<1x128xf32> to vector<256x128xf32>
    %38 = arith.mulf %36, %37 : vector<256x128xf32>
    %39 = vector.broadcast %16 : vector<1x128xf32> to vector<256x128xf32>
    %40 = arith.addf %38, %39 : vector<256x128xf32>
    %cst_12 = arith.constant 0.000000e+00 : f32
    %41 = vector.broadcast %cst_12 : f32 to vector<256x128xf32>
    %42 = arith.maximumf %40, %41 : vector<256x128xf32>
    %c0_13 = arith.constant 0 : index
    %c0_14 = arith.constant 0 : index
    %c0_15 = arith.constant 0 : index
    %43 = vector.load %arg2[%c0_13, %c0_14, %c0_15] : memref<2x128x128xf32, #tpu.memory_space<vmem>>, vector<1x128x128xf32>
    %44 = vector.shape_cast %43 : vector<1x128x128xf32> to vector<128x128xf32>
    %cst_16 = arith.constant dense<0.000000e+00> : vector<256x128xf32>
    %45 = tpu.matmul %42, %44, %cst_16 {dimension_numbers = #tpu.dot_dimension_numbers<[1], [0], [0], [1], [0, 0, 1, 1], [], []>} : vector<256x128xf32>, vector<128x128xf32>, vector<256x128xf32> -> vector<256x128xf32>
    %c5 = arith.constant 5 : index
    %c0_17 = arith.constant 0 : index
    %46 = vector.load %arg3[%c5, %c0_17] : memref<24x128xf32, #tpu.memory_space<vmem>>, vector<1x128xf32>
    %47 = vector.broadcast %46 : vector<1x128xf32> to vector<256x128xf32>
    %48 = arith.addf %45, %47 : vector<256x128xf32>
    %c6 = arith.constant 6 : index
    %c0_18 = arith.constant 0 : index
    %49 = vector.load %arg3[%c6, %c0_18] : memref<24x128xf32, #tpu.memory_space<vmem>>, vector<1x128xf32>
    %c7 = arith.constant 7 : index
    %c0_19 = arith.constant 0 : index
    %50 = vector.load %arg3[%c7, %c0_19] : memref<24x128xf32, #tpu.memory_space<vmem>>, vector<1x128xf32>
    %cst_20 = arith.constant dense<0.000000e+00> : vector<256xf32>
    %51 = vector.multi_reduction <add>, %48, %cst_20 [1] : vector<256x128xf32> to vector<256xf32>
    %52 = vector.shape_cast %51 : vector<256xf32> to vector<256x1xf32>
    %cst_21 = arith.constant 3.125000e-02 : f32
    %53 = vector.broadcast %cst_21 : f32 to vector<256x1xf32>
    %54 = arith.mulf %52, %53 : vector<256x1xf32>
    %55 = arith.mulf %48, %48 : vector<256x128xf32>
    %cst_22 = arith.constant dense<0.000000e+00> : vector<256xf32>
    %56 = vector.multi_reduction <add>, %55, %cst_22 [1] : vector<256x128xf32> to vector<256xf32>
    %57 = vector.shape_cast %56 : vector<256xf32> to vector<256x1xf32>
    %cst_23 = arith.constant 3.125000e-02 : f32
    %58 = vector.broadcast %cst_23 : f32 to vector<256x1xf32>
    %59 = arith.mulf %57, %58 : vector<256x1xf32>
    %60 = arith.mulf %54, %54 : vector<256x1xf32>
    %61 = arith.subf %59, %60 : vector<256x1xf32>
    %cst_24 = arith.constant 0.000000e+00 : f32
    %62 = vector.broadcast %cst_24 : f32 to vector<256x1xf32>
    %63 = arith.maximumf %61, %62 : vector<256x1xf32>
    %64 = vector.broadcast %54 : vector<256x1xf32> to vector<256x128xf32>
    %65 = arith.subf %48, %64 : vector<256x128xf32>
    %cst_25 = arith.constant 9.99999974E-6 : f32
    %66 = vector.broadcast %cst_25 : f32 to vector<256x1xf32>
    %67 = arith.addf %63, %66 : vector<256x1xf32>
    %68 = math.rsqrt %67 : vector<256x1xf32>
    %69 = vector.broadcast %68 : vector<256x1xf32> to vector<256x128xf32>
    %70 = arith.mulf %65, %69 : vector<256x128xf32>
    %71 = vector.broadcast %49 : vector<1x128xf32> to vector<256x128xf32>
    %72 = arith.mulf %70, %71 : vector<256x128xf32>
    %73 = vector.broadcast %50 : vector<1x128xf32> to vector<256x128xf32>
    %74 = arith.addf %72, %73 : vector<256x128xf32>
    %cst_26 = arith.constant 0.000000e+00 : f32
    %75 = vector.broadcast %cst_26 : f32 to vector<256x128xf32>
    %76 = arith.maximumf %74, %75 : vector<256x128xf32>
    %c1_27 = arith.constant 1 : index
    %c0_28 = arith.constant 0 : index
    %c0_29 = arith.constant 0 : index
    %77 = vector.load %arg2[%c1_27, %c0_28, %c0_29] : memref<2x128x128xf32, #tpu.memory_space<vmem>>, vector<1x128x128xf32>
    %78 = vector.shape_cast %77 : vector<1x128x128xf32> to vector<128x128xf32>
    %cst_30 = arith.constant dense<0.000000e+00> : vector<256x128xf32>
    %79 = tpu.matmul %76, %78, %cst_30 {dimension_numbers = #tpu.dot_dimension_numbers<[1], [0], [0], [1], [0, 0, 1, 1], [], []>} : vector<256x128xf32>, vector<128x128xf32>, vector<256x128xf32> -> vector<256x128xf32>
    %c8 = arith.constant 8 : index
    %c0_31 = arith.constant 0 : index
    %80 = vector.load %arg3[%c8, %c0_31] : memref<24x128xf32, #tpu.memory_space<vmem>>, vector<1x128xf32>
    %81 = vector.broadcast %80 : vector<1x128xf32> to vector<256x128xf32>
    %82 = arith.addf %79, %81 : vector<256x128xf32>
    %c9 = arith.constant 9 : index
    %c0_32 = arith.constant 0 : index
    %83 = vector.load %arg3[%c9, %c0_32] : memref<24x128xf32, #tpu.memory_space<vmem>>, vector<1x128xf32>
    %c10 = arith.constant 10 : index
    %c0_33 = arith.constant 0 : index
    %84 = vector.load %arg3[%c10, %c0_33] : memref<24x128xf32, #tpu.memory_space<vmem>>, vector<1x128xf32>
    %cst_34 = arith.constant dense<0.000000e+00> : vector<256xf32>
    %85 = vector.multi_reduction <add>, %82, %cst_34 [1] : vector<256x128xf32> to vector<256xf32>
    %86 = vector.shape_cast %85 : vector<256xf32> to vector<256x1xf32>
    %cst_35 = arith.constant 3.125000e-02 : f32
    %87 = vector.broadcast %cst_35 : f32 to vector<256x1xf32>
    %88 = arith.mulf %86, %87 : vector<256x1xf32>
    %89 = arith.mulf %82, %82 : vector<256x128xf32>
    %cst_36 = arith.constant dense<0.000000e+00> : vector<256xf32>
    %90 = vector.multi_reduction <add>, %89, %cst_36 [1] : vector<256x128xf32> to vector<256xf32>
    %91 = vector.shape_cast %90 : vector<256xf32> to vector<256x1xf32>
    %cst_37 = arith.constant 3.125000e-02 : f32
    %92 = vector.broadcast %cst_37 : f32 to vector<256x1xf32>
    %93 = arith.mulf %91, %92 : vector<256x1xf32>
    %94 = arith.mulf %88, %88 : vector<256x1xf32>
    %95 = arith.subf %93, %94 : vector<256x1xf32>
    %cst_38 = arith.constant 0.000000e+00 : f32
    %96 = vector.broadcast %cst_38 : f32 to vector<256x1xf32>
    %97 = arith.maximumf %95, %96 : vector<256x1xf32>
    %98 = vector.broadcast %88 : vector<256x1xf32> to vector<256x128xf32>
    %99 = arith.subf %82, %98 : vector<256x128xf32>
    %cst_39 = arith.constant 9.99999974E-6 : f32
    %100 = vector.broadcast %cst_39 : f32 to vector<256x1xf32>
    %101 = arith.addf %97, %100 : vector<256x1xf32>
    %102 = math.rsqrt %101 : vector<256x1xf32>
    %103 = vector.broadcast %102 : vector<256x1xf32> to vector<256x128xf32>
    %104 = arith.mulf %99, %103 : vector<256x128xf32>
    %105 = vector.broadcast %83 : vector<1x128xf32> to vector<256x128xf32>
    %106 = arith.mulf %104, %105 : vector<256x128xf32>
    %107 = vector.broadcast %84 : vector<1x128xf32> to vector<256x128xf32>
    %108 = arith.addf %106, %107 : vector<256x128xf32>
    %cst_40 = arith.constant 0.000000e+00 : f32
    %109 = vector.broadcast %cst_40 : f32 to vector<256x128xf32>
    %110 = arith.maximumf %108, %109 : vector<256x128xf32>
    %c16 = arith.constant 16 : index
    %c0_41 = arith.constant 0 : index
    %111 = vector.load %arg3[%c16, %c0_41] : memref<24x128xf32, #tpu.memory_space<vmem>>, vector<8x128xf32>
    %c11 = arith.constant 11 : index
    %c0_42 = arith.constant 0 : index
    %112 = vector.load %arg3[%c11, %c0_42] : memref<24x128xf32, #tpu.memory_space<vmem>>, vector<1x1xf32>
    %113 = vector.extract_strided_slice %110 {offsets = [0, 0], sizes = [128, 128], strides = [1, 1]} : vector<256x128xf32> to vector<128x128xf32>
    %cst_43 = arith.constant dense<0.000000e+00> : vector<8x128xf32>
    %114 = tpu.matmul %111, %113, %cst_43 {dimension_numbers = #tpu.dot_dimension_numbers<[1], [1], [0], [0], [0, 0, 1, 0], [], []>} : vector<8x128xf32>, vector<128x128xf32>, vector<8x128xf32> -> vector<8x128xf32>
    %115 = vector.extract_strided_slice %114 {offsets = [0, 0], sizes = [1, 128], strides = [1, 1]} : vector<8x128xf32> to vector<1x128xf32>
    %116 = vector.broadcast %112 : vector<1x1xf32> to vector<1x128xf32>
    %117 = arith.addf %115, %116 : vector<1x128xf32>
    %c0_44 = arith.constant 0 : index
    %c0_45 = arith.constant 0 : index
    %118 = vector.load %arg4[%c0_44, %c0_45] : memref<2x128xf32, #tpu.memory_space<vmem>>, vector<1x128xf32>
    tpu.vector_store %arg4[%c0_44, %c0_45], %117 {strides = array<i32>} : memref<2x128xf32, #tpu.memory_space<vmem>>, vector<1x128xf32>,
    %119 = vector.extract_strided_slice %110 {offsets = [128, 0], sizes = [128, 128], strides = [1, 1]} : vector<256x128xf32> to vector<128x128xf32>
    %cst_46 = arith.constant dense<0.000000e+00> : vector<8x128xf32>
    %120 = tpu.matmul %111, %119, %cst_46 {dimension_numbers = #tpu.dot_dimension_numbers<[1], [1], [0], [0], [0, 0, 1, 0], [], []>} : vector<8x128xf32>, vector<128x128xf32>, vector<8x128xf32> -> vector<8x128xf32>
    %121 = vector.extract_strided_slice %120 {offsets = [0, 0], sizes = [1, 128], strides = [1, 1]} : vector<8x128xf32> to vector<1x128xf32>
    %122 = vector.broadcast %112 : vector<1x1xf32> to vector<1x128xf32>
    %123 = arith.addf %121, %122 : vector<1x128xf32>
    %c1_47 = arith.constant 1 : index
    %c0_48 = arith.constant 0 : index
    %124 = vector.load %arg4[%c1_47, %c0_48] : memref<2x128xf32, #tpu.memory_space<vmem>>, vector<1x128xf32>
    tpu.vector_store %arg4[%c1_47, %c0_48], %123 {strides = array<i32>} : memref<2x128xf32, #tpu.memory_space<vmem>>, vector<1x128xf32>,
    return
  }
  func.func @transform_0(%arg0: i32) -> (i32, i32) {
    %c0_i32 = arith.constant 0 : i32
    %c0_i32_0 = arith.constant 0 : i32
    return %arg0, %c0_i32 : i32, i32
  }
  func.func @transform_1(%arg0: i32) -> (i32, i32, i32) {
    %c0_i32 = arith.constant 0 : i32
    %c0_i32_0 = arith.constant 0 : i32
    %c0_i32_1 = arith.constant 0 : i32
    %c0_i32_2 = arith.constant 0 : i32
    return %c0_i32, %c0_i32_0, %c0_i32_1 : i32, i32, i32
  }
  func.func @transform_2(%arg0: i32) -> (i32, i32) {
    %c0_i32 = arith.constant 0 : i32
    %c0_i32_0 = arith.constant 0 : i32
    %c0_i32_1 = arith.constant 0 : i32
    return %c0_i32, %c0_i32_0 : i32, i32
  }
  func.func @transform_3(%arg0: i32) -> (i32, i32) {
    %c0_i32 = arith.constant 0 : i32
    %c0_i32_0 = arith.constant 0 : i32
    return %arg0, %c0_i32 : i32, i32
  }
}

</mosaic_0001>

<llo_original>
// kernel: tpu_custom_call.1
$region0: #{tpu_custom_call.1}
  #allocation0 [shape = 'u32[]', space=smem, size = 0x4, offset = 0x4, fixed_abs, tag = 'smem constant byte address 0x4 - core index']
  #allocation1 [shape = 'u32[144,128]{1,0:T(1,128)}', space=vmem, size = 0x12000, scoped, tag = 'internal scratch']
  %s0 = inlined_call_operand.vmem [shape: f32[256,2], index: 0, kind: input, shape index: {}]
  %s1 = inlined_call_operand.vmem [shape: f32[2,128,128], index: 1, kind: input, shape index: {}]
  %s2 = inlined_call_operand.hbm [shape: f32[24,128], index: 2, kind: input, shape index: {}]
  %s3 = inlined_call_operand.hbm [shape: f32[2,128], index: 3, kind: output, shape index: {}]
  %s4 = sld [smem:[#allocation0]]
  $region26: #{tpu_custom_call.1} parent=0
    _
  %s6 = ssub.s32 1, %s4
  %s7 = scalar_select 0, %s6, %s4
  $region1: #{tpu_custom_call.1} parent=0
    #allocation2 [shape = 'u8[12288]{0}', space=vmem, size = 0x3000, scoped, tag = 'input window, operand 2, single buffered']
    #allocation3 [shape = 's32[1]{0}', space=sflag, size = 0x4, scoped, tag = 'scoped memory for tpu_custom_call.1']
    #allocation4 [shape = 's32[1]{0}', space=sflag, size = 0x4, scoped, tag = 'scoped memory for tpu_custom_call.1']
    #allocation5 [shape = 'u8[1024]{0}', space=vmem, size = 0x400, scoped, tag = 'output window, operand 0, single buffered']
    %8 = vsyncpa [#allocation3], 0
    %9 = vsyncpa [#allocation4], 0
    // Predicated region
    $region2: #{tpu_custom_call.1} parent=1 // pred_check
      _
    $region3: #{tpu_custom_call.1} parent=1 // pred_check_branch
      %11 = sbr.rel (0) target = $region5
    $region4: #{tpu_custom_call.1} parent=1 // pred_region
      _
    $region5: #{tpu_custom_call.1} parent=1 // pred_fallthru
      _
    // Predicated region
    $region6: #{tpu_custom_call.1} parent=1 // pred_check
      _
    $region7: #{tpu_custom_call.1} parent=1 // pred_check_branch
      %13 = sbr.rel (0) target = $region9
    $region8: #{tpu_custom_call.1} parent=1 // pred_region
      _
    $region9: #{tpu_custom_call.1} parent=1 // pred_fallthru
      _
    // Predicated region
    $region10: #{tpu_custom_call.1} parent=1 // pred_check
      _
    $region11: #{tpu_custom_call.1} parent=1 // pred_check_branch
      %15 = sbr.rel (0) target = $region13
    $region12: #{tpu_custom_call.1} parent=1 // pred_region
      %s17 = ssub.s32 384, 384
      %18 = vsyncadd [#allocation3], %s17
      %s19 = sshll.u32 [#allocation2], 4
      %s20 = int_to_ptr.vmem [resolvable:$true] %s19
      %25 = dma.hbm_to_vmem [thread:$0]  %s2, 384, %s20, [#allocation3], 128, 128, 8
    $region13: #{tpu_custom_call.1} parent=1 // pred_fallthru
      _
    // Predicated region
    $region14: #{tpu_custom_call.1} parent=1 // pred_check
      _
    $region15: #{tpu_custom_call.1} parent=1 // pred_check_branch
      %27 = sbr.rel (0) target = $region17
    $region16: #{tpu_custom_call.1} parent=1 // pred_region
      %28 = dma.done [#allocation3], 384
    $region17: #{tpu_custom_call.1} parent=1 // pred_fallthru
      _
    %v29 = vld [vmem:[%s0] sm:$0xff]
    %v30 = vld [vmem:[%s0 + $0x8] sm:$0xff]
    %v31 = vld [vmem:[%s0 + $0x10] sm:$0xff]
    %v32 = vld [vmem:[%s0 + $0x18] sm:$0xff]
    %v33 = vld [vmem:[%s0 + $0x20] sm:$0xff]
    %v34 = vld [vmem:[%s0 + $0x28] sm:$0xff]
    %v35 = vld [vmem:[%s0 + $0x30] sm:$0xff]
    %v36 = vld [vmem:[%s0 + $0x38] sm:$0xff]
    %v37 = vld [vmem:[%s0 + $0x40] sm:$0xff]
    %v38 = vld [vmem:[%s0 + $0x48] sm:$0xff]
    %v39 = vld [vmem:[%s0 + $0x50] sm:$0xff]
    %v40 = vld [vmem:[%s0 + $0x58] sm:$0xff]
    %v41 = vld [vmem:[%s0 + $0x60] sm:$0xff]
    %v42 = vld [vmem:[%s0 + $0x68] sm:$0xff]
    %v43 = vld [vmem:[%s0 + $0x70] sm:$0xff]
    %v44 = vld [vmem:[%s0 + $0x78] sm:$0xff]
    %v45 = vld [vmem:[%s0 + $0x80] sm:$0xff]
    %v46 = vld [vmem:[%s0 + $0x88] sm:$0xff]
    %v47 = vld [vmem:[%s0 + $0x90] sm:$0xff]
    %v48 = vld [vmem:[%s0 + $0x98] sm:$0xff]
    %v49 = vld [vmem:[%s0 + $0xa0] sm:$0xff]
    %v50 = vld [vmem:[%s0 + $0xa8] sm:$0xff]
    %v51 = vld [vmem:[%s0 + $0xb0] sm:$0xff]
    %v52 = vld [vmem:[%s0 + $0xb8] sm:$0xff]
    %v53 = vld [vmem:[%s0 + $0xc0] sm:$0xff]
    %v54 = vld [vmem:[%s0 + $0xc8] sm:$0xff]
    %v55 = vld [vmem:[%s0 + $0xd0] sm:$0xff]
    %v56 = vld [vmem:[%s0 + $0xd8] sm:$0xff]
    %v57 = vld [vmem:[%s0 + $0xe0] sm:$0xff]
    %v58 = vld [vmem:[%s0 + $0xe8] sm:$0xff]
    %v59 = vld [vmem:[%s0 + $0xf0] sm:$0xff]
    %v60 = vld [vmem:[%s0 + $0xf8] sm:$0xff]
    %v61 = vld [vmem:[#allocation2] sm:$0x1]
    %63 = vset.pattern.permute.xlu0 0
    %64 = vperm.xlu0 %63, %v29
    %v65 = vpop.permute.xlu0 %64
    %68 = vset.pattern.permute.xlu0 0
    %69 = vperm.xlu0 %68, %v30
    %v70 = vpop.permute.xlu0 %69
    %73 = vset.pattern.permute.xlu0 0
    %74 = vperm.xlu0 %73, %v31
    %v75 = vpop.permute.xlu0 %74
    %78 = vset.pattern.permute.xlu0 0
    %79 = vperm.xlu0 %78, %v32
    %v80 = vpop.permute.xlu0 %79
    %83 = vset.pattern.permute.xlu0 0
    %84 = vperm.xlu0 %83, %v33
    %v85 = vpop.permute.xlu0 %84
    %88 = vset.pattern.permute.xlu0 0
    %89 = vperm.xlu0 %88, %v34
    %v90 = vpop.permute.xlu0 %89
    %93 = vset.pattern.permute.xlu0 0
    %94 = vperm.xlu0 %93, %v35
    %v95 = vpop.permute.xlu0 %94
    %98 = vset.pattern.permute.xlu0 0
    %99 = vperm.xlu0 %98, %v36
    %v100 = vpop.permute.xlu0 %99
    %103 = vset.pattern.permute.xlu0 0
    %104 = vperm.xlu0 %103, %v37
    %v105 = vpop.permute.xlu0 %104
    %108 = vset.pattern.permute.xlu0 0
    %109 = vperm.xlu0 %108, %v38
    %v110 = vpop.permute.xlu0 %109
    %113 = vset.pattern.permute.xlu0 0
    %114 = vperm.xlu0 %113, %v39
    %v115 = vpop.permute.xlu0 %114
    %118 = vset.pattern.permute.xlu0 0
    %119 = vperm.xlu0 %118, %v40
    %v120 = vpop.permute.xlu0 %119
    %123 = vset.pattern.permute.xlu0 0
    %124 = vperm.xlu0 %123, %v41
    %v125 = vpop.permute.xlu0 %124
    %128 = vset.pattern.permute.xlu0 0
    %129 = vperm.xlu0 %128, %v42
    %v130 = vpop.permute.xlu0 %129
    %133 = vset.pattern.permute.xlu0 0
    %134 = vperm.xlu0 %133, %v43
    %v135 = vpop.permute.xlu0 %134
    %138 = vset.pattern.permute.xlu0 0
    %139 = vperm.xlu0 %138, %v44
    %v140 = vpop.permute.xlu0 %139
    %143 = vset.pattern.permute.xlu0 0
    %144 = vperm.xlu0 %143, %v45
    %v145 = vpop.permute.xlu0 %144
    %148 = vset.pattern.permute.xlu0 0
    %149 = vperm.xlu0 %148, %v46
    %v150 = vpop.permute.xlu0 %149
    %153 = vset.pattern.permute.xlu0 0
    %154 = vperm.xlu0 %153, %v47
    %v155 = vpop.permute.xlu0 %154
    %158 = vset.pattern.permute.xlu0 0
    %159 = vperm.xlu0 %158, %v48
    %v160 = vpop.permute.xlu0 %159
    %163 = vset.pattern.permute.xlu0 0
    %164 = vperm.xlu0 %163, %v49
    %v165 = vpop.permute.xlu0 %164
    %168 = vset.pattern.permute.xlu0 0
    %169 = vperm.xlu0 %168, %v50
    %v170 = vpop.permute.xlu0 %169
    %173 = vset.pattern.permute.xlu0 0
    %174 = vperm.xlu0 %173, %v51
    %v175 = vpop.permute.xlu0 %174
    %178 = vset.pattern.permute.xlu0 0
    %179 = vperm.xlu0 %178, %v52
    %v180 = vpop.permute.xlu0 %179
    %183 = vset.pattern.permute.xlu0 0
    %184 = vperm.xlu0 %183, %v53
    %v185 = vpop.permute.xlu0 %184
    %188 = vset.pattern.permute.xlu0 0
    %189 = vperm.xlu0 %188, %v54
    %v190 = vpop.permute.xlu0 %189
    %193 = vset.pattern.permute.xlu0 0
    %194 = vperm.xlu0 %193, %v55
    %v195 = vpop.permute.xlu0 %194
    %198 = vset.pattern.permute.xlu0 0
    %199 = vperm.xlu0 %198, %v56
    %v200 = vpop.permute.xlu0 %199
    %203 = vset.pattern.permute.xlu0 0
    %204 = vperm.xlu0 %203, %v57
    %v205 = vpop.permute.xlu0 %204
    %208 = vset.pattern.permute.xlu0 0
    %209 = vperm.xlu0 %208, %v58
    %v210 = vpop.permute.xlu0 %209
    %213 = vset.pattern.permute.xlu0 0
    %214 = vperm.xlu0 %213, %v59
    %v215 = vpop.permute.xlu0 %214
    %218 = vset.pattern.permute.xlu0 0
    %219 = vperm.xlu0 %218, %v60
    %v220 = vpop.permute.xlu0 %219
    %v222 = vlaneseq
    %v223 = vshrl.u32 %v222, 7
    %v224 = vsub.s32 0, %v223
    %v225 = vrot.slane %v61, %v224
    %v226 = vmul.f32 %v65, %v225
    %v227 = vmul.f32 %v70, %v225
    %v228 = vmul.f32 %v75, %v225
    %v229 = vmul.f32 %v80, %v225
    %v230 = vmul.f32 %v85, %v225
    %v231 = vmul.f32 %v90, %v225
    %v232 = vmul.f32 %v95, %v225
    %v233 = vmul.f32 %v100, %v225
    %v234 = vmul.f32 %v105, %v225
    %v235 = vmul.f32 %v110, %v225
    %v236 = vmul.f32 %v115, %v225
    %v237 = vmul.f32 %v120, %v225
    %v238 = vmul.f32 %v125, %v225
    %v239 = vmul.f32 %v130, %v225
    %v240 = vmul.f32 %v135, %v225
    %v241 = vmul.f32 %v140, %v225
    %v242 = vmul.f32 %v145, %v225
    %v243 = vmul.f32 %v150, %v225
    %v244 = vmul.f32 %v155, %v225
    %v245 = vmul.f32 %v160, %v225
    %v246 = vmul.f32 %v165, %v225
    %v247 = vmul.f32 %v170, %v225
    %v248 = vmul.f32 %v175, %v225
    %v249 = vmul.f32 %v180, %v225
    %v250 = vmul.f32 %v185, %v225
    %v251 = vmul.f32 %v190, %v225
    %v252 = vmul.f32 %v195, %v225
    %v253 = vmul.f32 %v200, %v225
    %v254 = vmul.f32 %v205, %v225
    %v255 = vmul.f32 %v210, %v225
    %v256 = vmul.f32 %v215, %v225
    %v257 = vmul.f32 %v220, %v225
    %v258 = vld [vmem:[#allocation2 + $0x1] sm:$0x1]
    %259 = vset.pattern.permute.xlu0 1
    %260 = vperm.xlu0 %259, %v29
    %v261 = vpop.permute.xlu0 %260
    %263 = vset.pattern.permute.xlu0 1
    %264 = vperm.xlu0 %263, %v30
    %v265 = vpop.permute.xlu0 %264
    %267 = vset.pattern.permute.xlu0 1
    %268 = vperm.xlu0 %267, %v31
    %v269 = vpop.permute.xlu0 %268
    %271 = vset.pattern.permute.xlu0 1
    %272 = vperm.xlu0 %271, %v32
    %v273 = vpop.permute.xlu0 %272
    %275 = vset.pattern.permute.xlu0 1
    %276 = vperm.xlu0 %275, %v33
    %v277 = vpop.permute.xlu0 %276
    %279 = vset.pattern.permute.xlu0 1
    %280 = vperm.xlu0 %279, %v34
    %v281 = vpop.permute.xlu0 %280
    %283 = vset.pattern.permute.xlu0 1
    %284 = vperm.xlu0 %283, %v35
    %v285 = vpop.permute.xlu0 %284
    %287 = vset.pattern.permute.xlu0 1
    %288 = vperm.xlu0 %287, %v36
    %v289 = vpop.permute.xlu0 %288
    %291 = vset.pattern.permute.xlu0 1
    %292 = vperm.xlu0 %291, %v37
    %v293 = vpop.permute.xlu0 %292
    %295 = vset.pattern.permute.xlu0 1
    %296 = vperm.xlu0 %295, %v38
    %v297 = vpop.permute.xlu0 %296
    %299 = vset.pattern.permute.xlu0 1
    %300 = vperm.xlu0 %299, %v39
    %v301 = vpop.permute.xlu0 %300
    %303 = vset.pattern.permute.xlu0 1
    %304 = vperm.xlu0 %303, %v40
    %v305 = vpop.permute.xlu0 %304
    %307 = vset.pattern.permute.xlu0 1
    %308 = vperm.xlu0 %307, %v41
    %v309 = vpop.permute.xlu0 %308
    %311 = vset.pattern.permute.xlu0 1
    %312 = vperm.xlu0 %311, %v42
    %v313 = vpop.permute.xlu0 %312
    %315 = vset.pattern.permute.xlu0 1
    %316 = vperm.xlu0 %315, %v43
    %v317 = vpop.permute.xlu0 %316
    %319 = vset.pattern.permute.xlu0 1
    %320 = vperm.xlu0 %319, %v44
    %v321 = vpop.permute.xlu0 %320
    %323 = vset.pattern.permute.xlu0 1
    %324 = vperm.xlu0 %323, %v45
    %v325 = vpop.permute.xlu0 %324
    %327 = vset.pattern.permute.xlu0 1
    %328 = vperm.xlu0 %327, %v46
    %v329 = vpop.permute.xlu0 %328
    %331 = vset.pattern.permute.xlu0 1
    %332 = vperm.xlu0 %331, %v47
    %v333 = vpop.permute.xlu0 %332
    %335 = vset.pattern.permute.xlu0 1
    %336 = vperm.xlu0 %335, %v48
    %v337 = vpop.permute.xlu0 %336
    %339 = vset.pattern.permute.xlu0 1
    %340 = vperm.xlu0 %339, %v49
    %v341 = vpop.permute.xlu0 %340
    %343 = vset.pattern.permute.xlu0 1
    %344 = vperm.xlu0 %343, %v50
    %v345 = vpop.permute.xlu0 %344
    %347 = vset.pattern.permute.xlu0 1
    %348 = vperm.xlu0 %347, %v51
    %v349 = vpop.permute.xlu0 %348
    %351 = vset.pattern.permute.xlu0 1
    %352 = vperm.xlu0 %351, %v52
    %v353 = vpop.permute.xlu0 %352
    %355 = vset.pattern.permute.xlu0 1
    %356 = vperm.xlu0 %355, %v53
    %v357 = vpop.permute.xlu0 %356
    %359 = vset.pattern.permute.xlu0 1
    %360 = vperm.xlu0 %359, %v54
    %v361 = vpop.permute.xlu0 %360
    %363 = vset.pattern.permute.xlu0 1
    %364 = vperm.xlu0 %363, %v55
    %v365 = vpop.permute.xlu0 %364
    %367 = vset.pattern.permute.xlu0 1
    %368 = vperm.xlu0 %367, %v56
    %v369 = vpop.permute.xlu0 %368
    %371 = vset.pattern.permute.xlu0 1
    %372 = vperm.xlu0 %371, %v57
    %v373 = vpop.permute.xlu0 %372
    %375 = vset.pattern.permute.xlu0 1
    %376 = vperm.xlu0 %375, %v58
    %v377 = vpop.permute.xlu0 %376
    %379 = vset.pattern.permute.xlu0 1
    %380 = vperm.xlu0 %379, %v59
    %v381 = vpop.permute.xlu0 %380
    %383 = vset.pattern.permute.xlu0 1
    %384 = vperm.xlu0 %383, %v60
    %v385 = vpop.permute.xlu0 %384
    %v387 = vlaneseq
    %v388 = vshrl.u32 %v387, 7
    %v389 = vsub.s32 0, %v388
    %v390 = vrot.slane %v258, %v389
    %v391 = vmul.f32 %v261, %v390
    %v392 = vmul.f32 %v265, %v390
    %v393 = vmul.f32 %v269, %v390
    %v394 = vmul.f32 %v273, %v390
    %v395 = vmul.f32 %v277, %v390
    %v396 = vmul.f32 %v281, %v390
    %v397 = vmul.f32 %v285, %v390
    %v398 = vmul.f32 %v289, %v390
    %v399 = vmul.f32 %v293, %v390
    %v400 = vmul.f32 %v297, %v390
    %v401 = vmul.f32 %v301, %v390
    %v402 = vmul.f32 %v305, %v390
    %v403 = vmul.f32 %v309, %v390
    %v404 = vmul.f32 %v313, %v390
    %v405 = vmul.f32 %v317, %v390
    %v406 = vmul.f32 %v321, %v390
    %v407 = vmul.f32 %v325, %v390
    %v408 = vmul.f32 %v329, %v390
    %v409 = vmul.f32 %v333, %v390
    %v410 = vmul.f32 %v337, %v390
    %v411 = vmul.f32 %v341, %v390
    %v412 = vmul.f32 %v345, %v390
    %v413 = vmul.f32 %v349, %v390
    %v414 = vmul.f32 %v353, %v390
    %v415 = vmul.f32 %v357, %v390
    %v416 = vmul.f32 %v361, %v390
    %v417 = vmul.f32 %v365, %v390
    %v418 = vmul.f32 %v369, %v390
    %v419 = vmul.f32 %v373, %v390
    %v420 = vmul.f32 %v377, %v390
    %v421 = vmul.f32 %v381, %v390
    %v422 = vmul.f32 %v385, %v390
    %v423 = vadd.f32 %v226, %v391
    %v424 = vadd.f32 %v227, %v392
    %v425 = vadd.f32 %v228, %v393
    %v426 = vadd.f32 %v229, %v394
    %v427 = vadd.f32 %v230, %v395
    %v428 = vadd.f32 %v231, %v396
    %v429 = vadd.f32 %v232, %v397
    %v430 = vadd.f32 %v233, %v398
    %v431 = vadd.f32 %v234, %v399
    %v432 = vadd.f32 %v235, %v400
    %v433 = vadd.f32 %v236, %v401
    %v434 = vadd.f32 %v237, %v402
    %v435 = vadd.f32 %v238, %v403
    %v436 = vadd.f32 %v239, %v404
    %v437 = vadd.f32 %v240, %v405
    %v438 = vadd.f32 %v241, %v406
    %v439 = vadd.f32 %v242, %v407
    %v440 = vadd.f32 %v243, %v408
    %v441 = vadd.f32 %v244, %v409
    %v442 = vadd.f32 %v245, %v410
    %v443 = vadd.f32 %v246, %v411
    %v444 = vadd.f32 %v247, %v412
    %v445 = vadd.f32 %v248, %v413
    %v446 = vadd.f32 %v249, %v414
    %v447 = vadd.f32 %v250, %v415
    %v448 = vadd.f32 %v251, %v416
    %v449 = vadd.f32 %v252, %v417
    %v450 = vadd.f32 %v253, %v418
    %v451 = vadd.f32 %v254, %v419
    %v452 = vadd.f32 %v255, %v420
    %v453 = vadd.f32 %v256, %v421
    %v454 = vadd.f32 %v257, %v422
    %v455 = vld [vmem:[#allocation2 + $0x2] sm:$0x1]
    %v456 = vlaneseq
    %v457 = vshrl.u32 %v456, 7
    %v458 = vsub.s32 0, %v457
    %v459 = vrot.slane %v455, %v458
    %v460 = vadd.f32 %v423, %v459
    %v461 = vadd.f32 %v424, %v459
    %v462 = vadd.f32 %v425, %v459
    %v463 = vadd.f32 %v426, %v459
    %v464 = vadd.f32 %v427, %v459
    %v465 = vadd.f32 %v428, %v459
    %v466 = vadd.f32 %v429, %v459
    %v467 = vadd.f32 %v430, %v459
    %v468 = vadd.f32 %v431, %v459
    %v469 = vadd.f32 %v432, %v459
    %v470 = vadd.f32 %v433, %v459
    %v471 = vadd.f32 %v434, %v459
    %v472 = vadd.f32 %v435, %v459
    %v473 = vadd.f32 %v436, %v459
    %v474 = vadd.f32 %v437, %v459
    %v475 = vadd.f32 %v438, %v459
    %v476 = vadd.f32 %v439, %v459
    %v477 = vadd.f32 %v440, %v459
    %v478 = vadd.f32 %v441, %v459
    %v479 = vadd.f32 %v442, %v459
    %v480 = vadd.f32 %v443, %v459
    %v481 = vadd.f32 %v444, %v459
    %v482 = vadd.f32 %v445, %v459
    %v483 = vadd.f32 %v446, %v459
    %v484 = vadd.f32 %v447, %v459
    %v485 = vadd.f32 %v448, %v459
    %v486 = vadd.f32 %v449, %v459
    %v487 = vadd.f32 %v450, %v459
    %v488 = vadd.f32 %v451, %v459
    %v489 = vadd.f32 %v452, %v459
    %v490 = vadd.f32 %v453, %v459
    %v491 = vadd.f32 %v454, %v459
    %v492 = vld [vmem:[#allocation2 + $0x3] sm:$0x1]
    %v493 = vld [vmem:[#allocation2 + $0x4] sm:$0x1]
    %494 = vadd.xlane.f32.xlu0 %v460
    %v495 = vpop.xlane.xlu0 %494
    %496 = vadd.xlane.f32.xlu0 %v461
    %v497 = vpop.xlane.xlu0 %496
    %498 = vadd.xlane.f32.xlu0 %v462
    %v499 = vpop.xlane.xlu0 %498
    %500 = vadd.xlane.f32.xlu0 %v463
    %v501 = vpop.xlane.xlu0 %500
    %502 = vadd.xlane.f32.xlu0 %v464
    %v503 = vpop.xlane.xlu0 %502
    %504 = vadd.xlane.f32.xlu0 %v465
    %v505 = vpop.xlane.xlu0 %504
    %506 = vadd.xlane.f32.xlu0 %v466
    %v507 = vpop.xlane.xlu0 %506
    %508 = vadd.xlane.f32.xlu0 %v467
    %v509 = vpop.xlane.xlu0 %508
    %510 = vadd.xlane.f32.xlu0 %v468
    %v511 = vpop.xlane.xlu0 %510
    %512 = vadd.xlane.f32.xlu0 %v469
    %v513 = vpop.xlane.xlu0 %512
    %514 = vadd.xlane.f32.xlu0 %v470
    %v515 = vpop.xlane.xlu0 %514
    %516 = vadd.xlane.f32.xlu0 %v471
    %v517 = vpop.xlane.xlu0 %516
    %518 = vadd.xlane.f32.xlu0 %v472
    %v519 = vpop.xlane.xlu0 %518
    %520 = vadd.xlane.f32.xlu0 %v473
    %v521 = vpop.xlane.xlu0 %520
    %522 = vadd.xlane.f32.xlu0 %v474
    %v523 = vpop.xlane.xlu0 %522
    %524 = vadd.xlane.f32.xlu0 %v475
    %v525 = vpop.xlane.xlu0 %524
    %526 = vadd.xlane.f32.xlu0 %v476
    %v527 = vpop.xlane.xlu0 %526
    %528 = vadd.xlane.f32.xlu0 %v477
    %v529 = vpop.xlane.xlu0 %528
    %530 = vadd.xlane.f32.xlu0 %v478
    %v531 = vpop.xlane.xlu0 %530
    %532 = vadd.xlane.f32.xlu0 %v479
    %v533 = vpop.xlane.xlu0 %532
    %534 = vadd.xlane.f32.xlu0 %v480
    %v535 = vpop.xlane.xlu0 %534
    %536 = vadd.xlane.f32.xlu0 %v481
    %v537 = vpop.xlane.xlu0 %536
    %538 = vadd.xlane.f32.xlu0 %v482
    %v539 = vpop.xlane.xlu0 %538
    %540 = vadd.xlane.f32.xlu0 %v483
    %v541 = vpop.xlane.xlu0 %540
    %542 = vadd.xlane.f32.xlu0 %v484
    %v543 = vpop.xlane.xlu0 %542
    %544 = vadd.xlane.f32.xlu0 %v485
    %v545 = vpop.xlane.xlu0 %544
    %546 = vadd.xlane.f32.xlu0 %v486
    %v547 = vpop.xlane.xlu0 %546
    %548 = vadd.xlane.f32.xlu0 %v487
    %v549 = vpop.xlane.xlu0 %548
    %550 = vadd.xlane.f32.xlu0 %v488
    %v551 = vpop.xlane.xlu0 %550
    %552 = vadd.xlane.f32.xlu0 %v489
    %v553 = vpop.xlane.xlu0 %552
    %554 = vadd.xlane.f32.xlu0 %v490
    %v555 = vpop.xlane.xlu0 %554
    %556 = vadd.xlane.f32.xlu0 %v491
    %v557 = vpop.xlane.xlu0 %556
    %v558 = vmul.f32 %v495, 0.03125
    %v559 = vmul.f32 %v497, 0.03125
    %v560 = vmul.f32 %v499, 0.03125
    %v561 = vmul.f32 %v501, 0.03125
    %v562 = vmul.f32 %v503, 0.03125
    %v563 = vmul.f32 %v505, 0.03125
    %v564 = vmul.f32 %v507, 0.03125
    %v565 = vmul.f32 %v509, 0.03125
    %v566 = vmul.f32 %v511, 0.03125
    %v567 = vmul.f32 %v513, 0.03125
    %v568 = vmul.f32 %v515, 0.03125
    %v569 = vmul.f32 %v517, 0.03125
    %v570 = vmul.f32 %v519, 0.03125
    %v571 = vmul.f32 %v521, 0.03125
    %v572 = vmul.f32 %v523, 0.03125
    %v573 = vmul.f32 %v525, 0.03125
    %v574 = vmul.f32 %v527, 0.03125
    %v575 = vmul.f32 %v529, 0.03125
    %v576 = vmul.f32 %v531, 0.03125
    %v577 = vmul.f32 %v533, 0.03125
    %v578 = vmul.f32 %v535, 0.03125
    %v579 = vmul.f32 %v537, 0.03125
    %v580 = vmul.f32 %v539, 0.03125
    %v581 = vmul.f32 %v541, 0.03125
    %v582 = vmul.f32 %v543, 0.03125
    %v583 = vmul.f32 %v545, 0.03125
    %v584 = vmul.f32 %v547, 0.03125
    %v585 = vmul.f32 %v549, 0.03125
    %v586 = vmul.f32 %v551, 0.03125
    %v587 = vmul.f32 %v553, 0.03125
    %v588 = vmul.f32 %v555, 0.03125
    %v589 = vmul.f32 %v557, 0.03125
    %v590 = vmul.f32 %v460, %v460
    %v591 = vmul.f32 %v461, %v461
    %v592 = vmul.f32 %v462, %v462
    %v593 = vmul.f32 %v463, %v463
    %v594 = vmul.f32 %v464, %v464
    %v595 = vmul.f32 %v465, %v465
    %v596 = vmul.f32 %v466, %v466
    %v597 = vmul.f32 %v467, %v467
    %v598 = vmul.f32 %v468, %v468
    %v599 = vmul.f32 %v469, %v469
    %v600 = vmul.f32 %v470, %v470
    %v601 = vmul.f32 %v471, %v471
    %v602 = vmul.f32 %v472, %v472
    %v603 = vmul.f32 %v473, %v473
    %v604 = vmul.f32 %v474, %v474
    %v605 = vmul.f32 %v475, %v475
    %v606 = vmul.f32 %v476, %v476
    %v607 = vmul.f32 %v477, %v477
    %v608 = vmul.f32 %v478, %v478
    %v609 = vmul.f32 %v479, %v479
    %v610 = vmul.f32 %v480, %v480
    %v611 = vmul.f32 %v481, %v481
    %v612 = vmul.f32 %v482, %v482
    %v613 = vmul.f32 %v483, %v483
    %v614 = vmul.f32 %v484, %v484
    %v615 = vmul.f32 %v485, %v485
    %v616 = vmul.f32 %v486, %v486
    %v617 = vmul.f32 %v487, %v487
    %v618 = vmul.f32 %v488, %v488
    %v619 = vmul.f32 %v489, %v489
    %v620 = vmul.f32 %v490, %v490
    %v621 = vmul.f32 %v491, %v491
    %622 = vadd.xlane.f32.xlu0 %v590
    %v623 = vpop.xlane.xlu0 %622
    %624 = vadd.xlane.f32.xlu0 %v591
    %v625 = vpop.xlane.xlu0 %624
    %626 = vadd.xlane.f32.xlu0 %v592
    %v627 = vpop.xlane.xlu0 %626
    %628 = vadd.xlane.f32.xlu0 %v593
    %v629 = vpop.xlane.xlu0 %628
    %630 = vadd.xlane.f32.xlu0 %v594
    %v631 = vpop.xlane.xlu0 %630
    %632 = vadd.xlane.f32.xlu0 %v595
    %v633 = vpop.xlane.xlu0 %632
    %634 = vadd.xlane.f32.xlu0 %v596
    %v635 = vpop.xlane.xlu0 %634
    %636 = vadd.xlane.f32.xlu0 %v597
    %v637 = vpop.xlane.xlu0 %636
    %638 = vadd.xlane.f32.xlu0 %v598
    %v639 = vpop.xlane.xlu0 %638
    %640 = vadd.xlane.f32.xlu0 %v599
    %v641 = vpop.xlane.xlu0 %640
    %642 = vadd.xlane.f32.xlu0 %v600
    %v643 = vpop.xlane.xlu0 %642
    %644 = vadd.xlane.f32.xlu0 %v601
    %v645 = vpop.xlane.xlu0 %644
    %646 = vadd.xlane.f32.xlu0 %v602
    %v647 = vpop.xlane.xlu0 %646
    %648 = vadd.xlane.f32.xlu0 %v603
    %v649 = vpop.xlane.xlu0 %648
    %650 = vadd.xlane.f32.xlu0 %v604
    %v651 = vpop.xlane.xlu0 %650
    %652 = vadd.xlane.f32.xlu0 %v605
    %v653 = vpop.xlane.xlu0 %652
    %654 = vadd.xlane.f32.xlu0 %v606
    %v655 = vpop.xlane.xlu0 %654
    %656 = vadd.xlane.f32.xlu0 %v607
    %v657 = vpop.xlane.xlu0 %656
    %658 = vadd.xlane.f32.xlu0 %v608
    %v659 = vpop.xlane.xlu0 %658
    %660 = vadd.xlane.f32.xlu0 %v609
    %v661 = vpop.xlane.xlu0 %660
    %662 = vadd.xlane.f32.xlu0 %v610
    %v663 = vpop.xlane.xlu0 %662
    %664 = vadd.xlane.f32.xlu0 %v611
    %v665 = vpop.xlane.xlu0 %664
    %666 = vadd.xlane.f32.xlu0 %v612
    %v667 = vpop.xlane.xlu0 %666
    %668 = vadd.xlane.f32.xlu0 %v613
    %v669 = vpop.xlane.xlu0 %668
    %670 = vadd.xlane.f32.xlu0 %v614
    %v671 = vpop.xlane.xlu0 %670
    %672 = vadd.xlane.f32.xlu0 %v615
    %v673 = vpop.xlane.xlu0 %672
    %674 = vadd.xlane.f32.xlu0 %v616
    %v675 = vpop.xlane.xlu0 %674
    %676 = vadd.xlane.f32.xlu0 %v617
    %v677 = vpop.xlane.xlu0 %676
    %678 = vadd.xlane.f32.xlu0 %v618
    %v679 = vpop.xlane.xlu0 %678
    %680 = vadd.xlane.f32.xlu0 %v619
    %v681 = vpop.xlane.xlu0 %680
    %682 = vadd.xlane.f32.xlu0 %v620
    %v683 = vpop.xlane.xlu0 %682
    %684 = vadd.xlane.f32.xlu0 %v621
    %v685 = vpop.xlane.xlu0 %684
    %v686 = vmul.f32 %v623, 0.03125
    %v687 = vmul.f32 %v625, 0.03125
    %v688 = vmul.f32 %v627, 0.03125
    %v689 = vmul.f32 %v629, 0.03125
    %v690 = vmul.f32 %v631, 0.03125
    %v691 = vmul.f32 %v633, 0.03125
    %v692 = vmul.f32 %v635, 0.03125
    %v693 = vmul.f32 %v637, 0.03125
    %v694 = vmul.f32 %v639, 0.03125
    %v695 = vmul.f32 %v641, 0.03125
    %v696 = vmul.f32 %v643, 0.03125
    %v697 = vmul.f32 %v645, 0.03125
    %v698 = vmul.f32 %v647, 0.03125
    %v699 = vmul.f32 %v649, 0.03125
    %v700 = vmul.f32 %v651, 0.03125
    %v701 = vmul.f32 %v653, 0.03125
    %v702 = vmul.f32 %v655, 0.03125
    %v703 = vmul.f32 %v657, 0.03125
    %v704 = vmul.f32 %v659, 0.03125
    %v705 = vmul.f32 %v661, 0.03125
    %v706 = vmul.f32 %v663, 0.03125
    %v707 = vmul.f32 %v665, 0.03125
    %v708 = vmul.f32 %v667, 0.03125
    %v709 = vmul.f32 %v669, 0.03125
    %v710 = vmul.f32 %v671, 0.03125
    %v711 = vmul.f32 %v673, 0.03125
    %v712 = vmul.f32 %v675, 0.03125
    %v713 = vmul.f32 %v677, 0.03125
    %v714 = vmul.f32 %v679, 0.03125
    %v715 = vmul.f32 %v681, 0.03125
    %v716 = vmul.f32 %v683, 0.03125
    %v717 = vmul.f32 %v685, 0.03125
    %v718 = vmul.f32 %v558, %v558
    %v719 = vmul.f32 %v559, %v559
    %v720 = vmul.f32 %v560, %v560
    %v721 = vmul.f32 %v561, %v561
    %v722 = vmul.f32 %v562, %v562
    %v723 = vmul.f32 %v563, %v563
    %v724 = vmul.f32 %v564, %v564
    %v725 = vmul.f32 %v565, %v565
    %v726 = vmul.f32 %v566, %v566
    %v727 = vmul.f32 %v567, %v567
    %v728 = vmul.f32 %v568, %v568
    %v729 = vmul.f32 %v569, %v569
    %v730 = vmul.f32 %v570, %v570
    %v731 = vmul.f32 %v571, %v571
    %v732 = vmul.f32 %v572, %v572
    %v733 = vmul.f32 %v573, %v573
    %v734 = vmul.f32 %v574, %v574
    %v735 = vmul.f32 %v575, %v575
    %v736 = vmul.f32 %v576, %v576
    %v737 = vmul.f32 %v577, %v577
    %v738 = vmul.f32 %v578, %v578
    %v739 = vmul.f32 %v579, %v579
    %v740 = vmul.f32 %v580, %v580
    %v741 = vmul.f32 %v581, %v581
    %v742 = vmul.f32 %v582, %v582
    %v743 = vmul.f32 %v583, %v583
    %v744 = vmul.f32 %v584, %v584
    %v745 = vmul.f32 %v585, %v585
    %v746 = vmul.f32 %v586, %v586
    %v747 = vmul.f32 %v587, %v587
    %v748 = vmul.f32 %v588, %v588
    %v749 = vmul.f32 %v589, %v589
    %v750 = vsub.f32 %v686, %v718
    %v751 = vsub.f32 %v687, %v719
    %v752 = vsub.f32 %v688, %v720
    %v753 = vsub.f32 %v689, %v721
    %v754 = vsub.f32 %v690, %v722
    %v755 = vsub.f32 %v691, %v723
    %v756 = vsub.f32 %v692, %v724
    %v757 = vsub.f32 %v693, %v725
    %v758 = vsub.f32 %v694, %v726
    %v759 = vsub.f32 %v695, %v727
    %v760 = vsub.f32 %v696, %v728
    %v761 = vsub.f32 %v697, %v729
    %v762 = vsub.f32 %v698, %v730
    %v763 = vsub.f32 %v699, %v731
    %v764 = vsub.f32 %v700, %v732
    %v765 = vsub.f32 %v701, %v733
    %v766 = vsub.f32 %v702, %v734
    %v767 = vsub.f32 %v703, %v735
    %v768 = vsub.f32 %v704, %v736
    %v769 = vsub.f32 %v705, %v737
    %v770 = vsub.f32 %v706, %v738
    %v771 = vsub.f32 %v707, %v739
    %v772 = vsub.f32 %v708, %v740
    %v773 = vsub.f32 %v709, %v741
    %v774 = vsub.f32 %v710, %v742
    %v775 = vsub.f32 %v711, %v743
    %v776 = vsub.f32 %v712, %v744
    %v777 = vsub.f32 %v713, %v745
    %v778 = vsub.f32 %v714, %v746
    %v779 = vsub.f32 %v715, %v747
    %v780 = vsub.f32 %v716, %v748
    %v781 = vsub.f32 %v717, %v749
    %v782 = vmax.f32 %v750, 0.0
    %v783 = vmax.f32 %v751, 0.0
    %v784 = vmax.f32 %v752, 0.0
    %v785 = vmax.f32 %v753, 0.0
    %v786 = vmax.f32 %v754, 0.0
    %v787 = vmax.f32 %v755, 0.0
    %v788 = vmax.f32 %v756, 0.0
    %v789 = vmax.f32 %v757, 0.0
    %v790 = vmax.f32 %v758, 0.0
    %v791 = vmax.f32 %v759, 0.0
    %v792 = vmax.f32 %v760, 0.0
    %v793 = vmax.f32 %v761, 0.0
    %v794 = vmax.f32 %v762, 0.0
    %v795 = vmax.f32 %v763, 0.0
    %v796 = vmax.f32 %v764, 0.0
    %v797 = vmax.f32 %v765, 0.0
    %v798 = vmax.f32 %v766, 0.0
    %v799 = vmax.f32 %v767, 0.0
    %v800 = vmax.f32 %v768, 0.0
    %v801 = vmax.f32 %v769, 0.0
    %v802 = vmax.f32 %v770, 0.0
    %v803 = vmax.f32 %v771, 0.0
    %v804 = vmax.f32 %v772, 0.0
    %v805 = vmax.f32 %v773, 0.0
    %v806 = vmax.f32 %v774, 0.0
    %v807 = vmax.f32 %v775, 0.0
    %v808 = vmax.f32 %v776, 0.0
    %v809 = vmax.f32 %v777, 0.0
    %v810 = vmax.f32 %v778, 0.0
    %v811 = vmax.f32 %v779, 0.0
    %v812 = vmax.f32 %v780, 0.0
    %v813 = vmax.f32 %v781, 0.0
    %v814 = vsub.f32 %v460, %v558
    %v815 = vsub.f32 %v461, %v559
    %v816 = vsub.f32 %v462, %v560
    %v817 = vsub.f32 %v463, %v561
    %v818 = vsub.f32 %v464, %v562
    %v819 = vsub.f32 %v465, %v563
    %v820 = vsub.f32 %v466, %v564
    %v821 = vsub.f32 %v467, %v565
    %v822 = vsub.f32 %v468, %v566
    %v823 = vsub.f32 %v469, %v567
    %v824 = vsub.f32 %v470, %v568
    %v825 = vsub.f32 %v471, %v569
    %v826 = vsub.f32 %v472, %v570
    %v827 = vsub.f32 %v473, %v571
    %v828 = vsub.f32 %v474, %v572
    %v829 = vsub.f32 %v475, %v573
    %v830 = vsub.f32 %v476, %v574
    %v831 = vsub.f32 %v477, %v575
    %v832 = vsub.f32 %v478, %v576
    %v833 = vsub.f32 %v479, %v577
    %v834 = vsub.f32 %v480, %v578
    %v835 = vsub.f32 %v481, %v579
    %v836 = vsub.f32 %v482, %v580
    %v837 = vsub.f32 %v483, %v581
    %v838 = vsub.f32 %v484, %v582
    %v839 = vsub.f32 %v485, %v583
    %v840 = vsub.f32 %v486, %v584
    %v841 = vsub.f32 %v487, %v585
    %v842 = vsub.f32 %v488, %v586
    %v843 = vsub.f32 %v489, %v587
    %v844 = vsub.f32 %v490, %v588
    %v845 = vsub.f32 %v491, %v589
    %v846 = vadd.f32 %v782, 1e-05
    %v847 = vadd.f32 %v783, 1e-05
    %v848 = vadd.f32 %v784, 1e-05
    %v849 = vadd.f32 %v785, 1e-05
    %v850 = vadd.f32 %v786, 1e-05
    %v851 = vadd.f32 %v787, 1e-05
    %v852 = vadd.f32 %v788, 1e-05
    %v853 = vadd.f32 %v789, 1e-05
    %v854 = vadd.f32 %v790, 1e-05
    %v855 = vadd.f32 %v791, 1e-05
    %v856 = vadd.f32 %v792, 1e-05
    %v857 = vadd.f32 %v793, 1e-05
    %v858 = vadd.f32 %v794, 1e-05
    %v859 = vadd.f32 %v795, 1e-05
    %v860 = vadd.f32 %v796, 1e-05
    %v861 = vadd.f32 %v797, 1e-05
    %v862 = vadd.f32 %v798, 1e-05
    %v863 = vadd.f32 %v799, 1e-05
    %v864 = vadd.f32 %v800, 1e-05
    %v865 = vadd.f32 %v801, 1e-05
    %v866 = vadd.f32 %v802, 1e-05
    %v867 = vadd.f32 %v803, 1e-05
    %v868 = vadd.f32 %v804, 1e-05
    %v869 = vadd.f32 %v805, 1e-05
    %v870 = vadd.f32 %v806, 1e-05
    %v871 = vadd.f32 %v807, 1e-05
    %v872 = vadd.f32 %v808, 1e-05
    %v873 = vadd.f32 %v809, 1e-05
    %v874 = vadd.f32 %v810, 1e-05
    %v875 = vadd.f32 %v811, 1e-05
    %v876 = vadd.f32 %v812, 1e-05
    %v877 = vadd.f32 %v813, 1e-05
    %v878 = vrsqrt.pop %v846
    %v879 = vrsqrt.pop %v847
    %v880 = vrsqrt.pop %v848
    %v881 = vrsqrt.pop %v849
    %v882 = vrsqrt.pop %v850
    %v883 = vrsqrt.pop %v851
    %v884 = vrsqrt.pop %v852
    %v885 = vrsqrt.pop %v853
    %v886 = vrsqrt.pop %v854
    %v887 = vrsqrt.pop %v855
    %v888 = vrsqrt.pop %v856
    %v889 = vrsqrt.pop %v857
    %v890 = vrsqrt.pop %v858
    %v891 = vrsqrt.pop %v859
    %v892 = vrsqrt.pop %v860
    %v893 = vrsqrt.pop %v861
    %v894 = vrsqrt.pop %v862
    %v895 = vrsqrt.pop %v863
    %v896 = vrsqrt.pop %v864
    %v897 = vrsqrt.pop %v865
    %v898 = vrsqrt.pop %v866
    %v899 = vrsqrt.pop %v867
    %v900 = vrsqrt.pop %v868
    %v901 = vrsqrt.pop %v869
    %v902 = vrsqrt.pop %v870
    %v903 = vrsqrt.pop %v871
    %v904 = vrsqrt.pop %v872
    %v905 = vrsqrt.pop %v873
    %v906 = vrsqrt.pop %v874
    %v907 = vrsqrt.pop %v875
    %v908 = vrsqrt.pop %v876
    %v909 = vrsqrt.pop %v877
    %v910 = vmul.f32 %v814, %v878
    %v911 = vmul.f32 %v815, %v879
    %v912 = vmul.f32 %v816, %v880
    %v913 = vmul.f32 %v817, %v881
    %v914 = vmul.f32 %v818, %v882
    %v915 = vmul.f32 %v819, %v883
    %v916 = vmul.f32 %v820, %v884
    %v917 = vmul.f32 %v821, %v885
    %v918 = vmul.f32 %v822, %v886
    %v919 = vmul.f32 %v823, %v887
    %v920 = vmul.f32 %v824, %v888
    %v921 = vmul.f32 %v825, %v889
    %v922 = vmul.f32 %v826, %v890
    %v923 = vmul.f32 %v827, %v891
    %v924 = vmul.f32 %v828, %v892
    %v925 = vmul.f32 %v829, %v893
    %v926 = vmul.f32 %v830, %v894
    %v927 = vmul.f32 %v831, %v895
    %v928 = vmul.f32 %v832, %v896
    %v929 = vmul.f32 %v833, %v897
    %v930 = vmul.f32 %v834, %v898
    %v931 = vmul.f32 %v835, %v899
    %v932 = vmul.f32 %v836, %v900
    %v933 = vmul.f32 %v837, %v901
    %v934 = vmul.f32 %v838, %v902
    %v935 = vmul.f32 %v839, %v903
    %v936 = vmul.f32 %v840, %v904
    %v937 = vmul.f32 %v841, %v905
    %v938 = vmul.f32 %v842, %v906
    %v939 = vmul.f32 %v843, %v907
    %v940 = vmul.f32 %v844, %v908
    %v941 = vmul.f32 %v845, %v909
    %v942 = vlaneseq
    %v943 = vshrl.u32 %v942, 7
    %v944 = vsub.s32 0, %v943
    %v945 = vrot.slane %v492, %v944
    %v946 = vmul.f32 %v910, %v945
    %v947 = vmul.f32 %v911, %v945
    %v948 = vmul.f32 %v912, %v945
    %v949 = vmul.f32 %v913, %v945
    %v950 = vmul.f32 %v914, %v945
    %v951 = vmul.f32 %v915, %v945
    %v952 = vmul.f32 %v916, %v945
    %v953 = vmul.f32 %v917, %v945
    %v954 = vmul.f32 %v918, %v945
    %v955 = vmul.f32 %v919, %v945
    %v956 = vmul.f32 %v920, %v945
    %v957 = vmul.f32 %v921, %v945
    %v958 = vmul.f32 %v922, %v945
    %v959 = vmul.f32 %v923, %v945
    %v960 = vmul.f32 %v924, %v945
    %v961 = vmul.f32 %v925, %v945
    %v962 = vmul.f32 %v926, %v945
    %v963 = vmul.f32 %v927, %v945
    %v964 = vmul.f32 %v928, %v945
    %v965 = vmul.f32 %v929, %v945
    %v966 = vmul.f32 %v930, %v945
    %v967 = vmul.f32 %v931, %v945
    %v968 = vmul.f32 %v932, %v945
    %v969 = vmul.f32 %v933, %v945
    %v970 = vmul.f32 %v934, %v945
    %v971 = vmul.f32 %v935, %v945
    %v972 = vmul.f32 %v936, %v945
    %v973 = vmul.f32 %v937, %v945
    %v974 = vmul.f32 %v938, %v945
    %v975 = vmul.f32 %v939, %v945
    %v976 = vmul.f32 %v940, %v945
    %v977 = vmul.f32 %v941, %v945
    %v978 = vlaneseq
    %v979 = vshrl.u32 %v978, 7
    %v980 = vsub.s32 0, %v979
    %v981 = vrot.slane %v493, %v980
    %v982 = vadd.f32 %v946, %v981
    %v983 = vadd.f32 %v947, %v981
    %v984 = vadd.f32 %v948, %v981
    %v985 = vadd.f32 %v949, %v981
    %v986 = vadd.f32 %v950, %v981
    %v987 = vadd.f32 %v951, %v981
    %v988 = vadd.f32 %v952, %v981
    %v989 = vadd.f32 %v953, %v981
    %v990 = vadd.f32 %v954, %v981
    %v991 = vadd.f32 %v955, %v981
    %v992 = vadd.f32 %v956, %v981
    %v993 = vadd.f32 %v957, %v981
    %v994 = vadd.f32 %v958, %v981
    %v995 = vadd.f32 %v959, %v981
    %v996 = vadd.f32 %v960, %v981
    %v997 = vadd.f32 %v961, %v981
    %v998 = vadd.f32 %v962, %v981
    %v999 = vadd.f32 %v963, %v981
    %v1000 = vadd.f32 %v964, %v981
    %v1001 = vadd.f32 %v965, %v981
    %v1002 = vadd.f32 %v966, %v981
    %v1003 = vadd.f32 %v967, %v981
    %v1004 = vadd.f32 %v968, %v981
    %v1005 = vadd.f32 %v969, %v981
    %v1006 = vadd.f32 %v970, %v981
    %v1007 = vadd.f32 %v971, %v981
    %v1008 = vadd.f32 %v972, %v981
    %v1009 = vadd.f32 %v973, %v981
    %v1010 = vadd.f32 %v974, %v981
    %v1011 = vadd.f32 %v975, %v981
    %v1012 = vadd.f32 %v976, %v981
    %v1013 = vadd.f32 %v977, %v981
    %v1014 = vmax.f32 %v982, 0.0
    %v1015 = vmax.f32 %v983, 0.0
    %v1016 = vmax.f32 %v984, 0.0
    %v1017 = vmax.f32 %v985, 0.0
    %v1018 = vmax.f32 %v986, 0.0
    %v1019 = vmax.f32 %v987, 0.0
    %v1020 = vmax.f32 %v988, 0.0
    %v1021 = vmax.f32 %v989, 0.0
    %v1022 = vmax.f32 %v990, 0.0
    %v1023 = vmax.f32 %v991, 0.0
    %v1024 = vmax.f32 %v992, 0.0
    %v1025 = vmax.f32 %v993, 0.0
    %v1026 = vmax.f32 %v994, 0.0
    %v1027 = vmax.f32 %v995, 0.0
    %v1028 = vmax.f32 %v996, 0.0
    %v1029 = vmax.f32 %v997, 0.0
    %v1030 = vmax.f32 %v998, 0.0
    %v1031 = vmax.f32 %v999, 0.0
    %v1032 = vmax.f32 %v1000, 0.0
    %v1033 = vmax.f32 %v1001, 0.0
    %v1034 = vmax.f32 %v1002, 0.0
    %v1035 = vmax.f32 %v1003, 0.0
    %v1036 = vmax.f32 %v1004, 0.0
    %v1037 = vmax.f32 %v1005, 0.0
    %v1038 = vmax.f32 %v1006, 0.0
    %v1039 = vmax.f32 %v1007, 0.0
    %v1040 = vmax.f32 %v1008, 0.0
    %v1041 = vmax.f32 %v1009, 0.0
    %v1042 = vmax.f32 %v1010, 0.0
    %v1043 = vmax.f32 %v1011, 0.0
    %v1044 = vmax.f32 %v1012, 0.0
    %v1045 = vmax.f32 %v1013, 0.0
    %v1046 = vld [vmem:[%s1] sm:$0xff]
    %v1047 = vld [vmem:[%s1 + $0x8] sm:$0xff]
    %v1048 = vld [vmem:[%s1 + $0x10] sm:$0xff]
    %v1049 = vld [vmem:[%s1 + $0x18] sm:$0xff]
    %v1050 = vld [vmem:[%s1 + $0x20] sm:$0xff]
    %v1051 = vld [vmem:[%s1 + $0x28] sm:$0xff]
    %v1052 = vld [vmem:[%s1 + $0x30] sm:$0xff]
    %v1053 = vld [vmem:[%s1 + $0x38] sm:$0xff]
    %v1054 = vld [vmem:[%s1 + $0x40] sm:$0xff]
    %v1055 = vld [vmem:[%s1 + $0x48] sm:$0xff]
    %v1056 = vld [vmem:[%s1 + $0x50] sm:$0xff]
    %v1057 = vld [vmem:[%s1 + $0x58] sm:$0xff]
    %v1058 = vld [vmem:[%s1 + $0x60] sm:$0xff]
    %v1059 = vld [vmem:[%s1 + $0x68] sm:$0xff]
    %v1060 = vld [vmem:[%s1 + $0x70] sm:$0xff]
    %v1061 = vld [vmem:[%s1 + $0x78] sm:$0xff]
    %v1062 = vld [vmem:[#allocation2 + $0x5] sm:$0x1]
    %v1063 = vlaneseq
    %v1064 = vshrl.u32 %v1063, 7
    %v1065 = vsub.s32 0, %v1064
    %v1066 = vrot.slane %v1062, %v1065
    %1067 = vmatprep.subr.mxu0 0.0
    %1068 = vmatpush1.msra.mxu0 %v1046
    %1069 = vmatprep.subr.mxu0 0.0
    %1070 = vmatpush1.msra.mxu0 %v1047
    %1071 = vmatprep.subr.mxu0 0.0
    %1072 = vmatpush1.msra.mxu0 %v1048
    %1073 = vmatprep.subr.mxu0 0.0
    %1074 = vmatpush1.msra.mxu0 %v1049
    %1075 = vmatprep.subr.mxu0 0.0
    %1076 = vmatpush1.msra.mxu0 %v1050
    %1077 = vmatprep.subr.mxu0 0.0
    %1078 = vmatpush1.msra.mxu0 %v1051
    %1079 = vmatprep.subr.mxu0 0.0
    %1080 = vmatpush1.msra.mxu0 %v1052
    %1081 = vmatprep.subr.mxu0 0.0
    %1082 = vmatpush1.msra.mxu0 %v1053
    %1083 = vmatprep.subr.mxu0 0.0
    %1084 = vmatpush1.msra.mxu0 %v1054
    %1085 = vmatprep.subr.mxu0 0.0
    %1086 = vmatpush1.msra.mxu0 %v1055
    %1087 = vmatprep.subr.mxu0 0.0
    %1088 = vmatpush1.msra.mxu0 %v1056
    %1089 = vmatprep.subr.mxu0 0.0
    %1090 = vmatpush1.msra.mxu0 %v1057
    %1091 = vmatprep.subr.mxu0 0.0
    %1092 = vmatpush1.msra.mxu0 %v1058
    %1093 = vmatprep.subr.mxu0 0.0
    %1094 = vmatpush1.msra.mxu0 %v1059
    %1095 = vmatprep.subr.mxu0 0.0
    %1096 = vmatpush1.msra.mxu0 %v1060
    %1097 = vmatprep.subr.mxu0 0.0
    %1098 = vmatpush1.msra.mxu0 %v1061
    %1099 = vmatprep.subr.mxu0 0.0
    %1100 = vmatpush1.msra.mxu0 0.0
    %1101 = vmatprep.subr.mxu0 0.0
    %1102 = vmatpush1.msra.mxu0 0.0
    %1103 = vmatprep.subr.mxu0 0.0
    %1104 = vmatpush1.msra.mxu0 0.0
    %1105 = vmatprep.subr.mxu0 0.0
    %1106 = vmatpush1.msra.mxu0 0.0
    %1107 = vmatprep.subr.mxu0 0.0
    %1108 = vmatpush1.msra.mxu0 0.0
    %1109 = vmatprep.subr.mxu0 0.0
    %1110 = vmatpush1.msra.mxu0 0.0
    %1111 = vmatprep.subr.mxu0 0.0
    %1112 = vmatpush1.msra.mxu0 0.0
    %1113 = vmatprep.subr.mxu0 0.0
    %1114 = vmatpush1.msra.mxu0 0.0
    %1115 = vmatprep.subr.mxu0 0.0
    %1116 = vmatpush1.msra.mxu0 0.0
    %1117 = vmatprep.subr.mxu0 0.0
    %1118 = vmatpush1.msra.mxu0 0.0
    %1119 = vmatprep.subr.mxu0 0.0
    %1120 = vmatpush1.msra.mxu0 0.0
    %1121 = vmatprep.subr.mxu0 0.0
    %1122 = vmatpush1.msra.mxu0 0.0
    %1123 = vmatprep.subr.mxu0 0.0
    %1124 = vmatpush1.msra.mxu0 0.0
    %1125 = vmatprep.subr.mxu0 0.0
    %1126 = vmatpush1.msra.mxu0 0.0
    %1127 = vmatprep.subr.mxu0 0.0
    %1128 = vmatpush1.msra.mxu0 0.0
    %1129 = vmatprep.subr.mxu0 0.0
    %1130 = vmatpush1.msra.mxu0 0.0
    %1131 = vmatprep.mubr.f32.mxu0 0.0
    %1132 = vmatmul.mubr.f32.gmra.mrb[0].mxu0 %v1014
    %v1133 = vpop.f32.mrb[0].mxu0
    %v1134 = vadd.f32 %v1066, %v1133
    %v1135 = vpop.f32.mrb[0].mxu0
    %1136 = vmatprep.mubr.f32.mxu0 0.0
    %1137 = vmatmul.mubr.f32.gmra.mrb[0].mxu0 %v1015
    %v1138 = vpop.f32.mrb[0].mxu0
    %v1139 = vadd.f32 %v1066, %v1138
    %v1140 = vpop.f32.mrb[0].mxu0
    %1141 = vmatprep.mubr.f32.mxu0 0.0
    %1142 = vmatmul.mubr.f32.gmra.mrb[0].mxu0 %v1016
    %v1143 = vpop.f32.mrb[0].mxu0
    %v1144 = vadd.f32 %v1066, %v1143
    %v1145 = vpop.f32.mrb[0].mxu0
    %1146 = vmatprep.mubr.f32.mxu0 0.0
    %1147 = vmatmul.mubr.f32.gmra.mrb[0].mxu0 %v1017
    %v1148 = vpop.f32.mrb[0].mxu0
    %v1149 = vadd.f32 %v1066, %v1148
    %v1150 = vpop.f32.mrb[0].mxu0
    %1151 = vmatprep.mubr.f32.mxu0 0.0
    %1152 = vmatmul.mubr.f32.gmra.mrb[0].mxu0 %v1018
    %v1153 = vpop.f32.mrb[0].mxu0
    %v1154 = vadd.f32 %v1066, %v1153
    %v1155 = vpop.f32.mrb[0].mxu0
    %1156 = vmatprep.mubr.f32.mxu0 0.0
    %1157 = vmatmul.mubr.f32.gmra.mrb[0].mxu0 %v1019
    %v1158 = vpop.f32.mrb[0].mxu0
    %v1159 = vadd.f32 %v1066, %v1158
    %v1160 = vpop.f32.mrb[0].mxu0
    %1161 = vmatprep.mubr.f32.mxu0 0.0
    %1162 = vmatmul.mubr.f32.gmra.mrb[0].mxu0 %v1020
    %v1163 = vpop.f32.mrb[0].mxu0
    %v1164 = vadd.f32 %v1066, %v1163
    %v1165 = vpop.f32.mrb[0].mxu0
    %1166 = vmatprep.mubr.f32.mxu0 0.0
    %1167 = vmatmul.mubr.f32.gmra.mrb[0].mxu0 %v1021
    %v1168 = vpop.f32.mrb[0].mxu0
    %v1169 = vadd.f32 %v1066, %v1168
    %v1170 = vpop.f32.mrb[0].mxu0
    %1171 = vmatprep.mubr.f32.mxu0 0.0
    %1172 = vmatmul.mubr.f32.gmra.mrb[0].mxu0 %v1022
    %v1173 = vpop.f32.mrb[0].mxu0
    %v1174 = vadd.f32 %v1066, %v1173
    %v1175 = vpop.f32.mrb[0].mxu0
    %1176 = vmatprep.mubr.f32.mxu0 0.0
    %1177 = vmatmul.mubr.f32.gmra.mrb[0].mxu0 %v1023
    %v1178 = vpop.f32.mrb[0].mxu0
    %v1179 = vadd.f32 %v1066, %v1178
    %v1180 = vpop.f32.mrb[0].mxu0
    %1181 = vmatprep.mubr.f32.mxu0 0.0
    %1182 = vmatmul.mubr.f32.gmra.mrb[0].mxu0 %v1024
    %v1183 = vpop.f32.mrb[0].mxu0
    %v1184 = vadd.f32 %v1066, %v1183
    %v1185 = vpop.f32.mrb[0].mxu0
    %1186 = vmatprep.mubr.f32.mxu0 0.0
    %1187 = vmatmul.mubr.f32.gmra.mrb[0].mxu0 %v1025
    %v1188 = vpop.f32.mrb[0].mxu0
    %v1189 = vadd.f32 %v1066, %v1188
    %v1190 = vpop.f32.mrb[0].mxu0
    %1191 = vmatprep.mubr.f32.mxu0 0.0
    %1192 = vmatmul.mubr.f32.gmra.mrb[0].mxu0 %v1026
    %v1193 = vpop.f32.mrb[0].mxu0
    %v1194 = vadd.f32 %v1066, %v1193
    %v1195 = vpop.f32.mrb[0].mxu0
    %1196 = vmatprep.mubr.f32.mxu0 0.0
    %1197 = vmatmul.mubr.f32.gmra.mrb[0].mxu0 %v1027
    %v1198 = vpop.f32.mrb[0].mxu0
    %v1199 = vadd.f32 %v1066, %v1198
    %v1200 = vpop.f32.mrb[0].mxu0
    %1201 = vmatprep.mubr.f32.mxu0 0.0
    %1202 = vmatmul.mubr.f32.gmra.mrb[0].mxu0 %v1028
    %v1203 = vpop.f32.mrb[0].mxu0
    %v1204 = vadd.f32 %v1066, %v1203
    %v1205 = vpop.f32.mrb[0].mxu0
    %1206 = vmatprep.mubr.f32.mxu0 0.0
    %1207 = vmatmul.mubr.f32.gmra.mrb[0].mxu0 %v1029
    %v1208 = vpop.f32.mrb[0].mxu0
    %v1209 = vadd.f32 %v1066, %v1208
    %v1210 = vpop.f32.mrb[0].mxu0
    %1211 = vmatprep.mubr.f32.mxu0 0.0
    %1212 = vmatmul.mubr.f32.gmra.mrb[0].mxu0 %v1030
    %v1213 = vpop.f32.mrb[0].mxu0
    %v1214 = vadd.f32 %v1066, %v1213
    %v1215 = vpop.f32.mrb[0].mxu0
    %1216 = vmatprep.mubr.f32.mxu0 0.0
    %1217 = vmatmul.mubr.f32.gmra.mrb[0].mxu0 %v1031
    %v1218 = vpop.f32.mrb[0].mxu0
    %v1219 = vadd.f32 %v1066, %v1218
    %v1220 = vpop.f32.mrb[0].mxu0
    %1221 = vmatprep.mubr.f32.mxu0 0.0
    %1222 = vmatmul.mubr.f32.gmra.mrb[0].mxu0 %v1032
    %v1223 = vpop.f32.mrb[0].mxu0
    %v1224 = vadd.f32 %v1066, %v1223
    %v1225 = vpop.f32.mrb[0].mxu0
    %1226 = vmatprep.mubr.f32.mxu0 0.0
    %1227 = vmatmul.mubr.f32.gmra.mrb[0].mxu0 %v1033
    %v1228 = vpop.f32.mrb[0].mxu0
    %v1229 = vadd.f32 %v1066, %v1228
    %v1230 = vpop.f32.mrb[0].mxu0
    %1231 = vmatprep.mubr.f32.mxu0 0.0
    %1232 = vmatmul.mubr.f32.gmra.mrb[0].mxu0 %v1034
    %v1233 = vpop.f32.mrb[0].mxu0
    %v1234 = vadd.f32 %v1066, %v1233
    %v1235 = vpop.f32.mrb[0].mxu0
    %1236 = vmatprep.mubr.f32.mxu0 0.0
    %1237 = vmatmul.mubr.f32.gmra.mrb[0].mxu0 %v1035
    %v1238 = vpop.f32.mrb[0].mxu0
    %v1239 = vadd.f32 %v1066, %v1238
    %v1240 = vpop.f32.mrb[0].mxu0
    %1241 = vmatprep.mubr.f32.mxu0 0.0
    %1242 = vmatmul.mubr.f32.gmra.mrb[0].mxu0 %v1036
    %v1243 = vpop.f32.mrb[0].mxu0
    %v1244 = vadd.f32 %v1066, %v1243
    %v1245 = vpop.f32.mrb[0].mxu0
    %1246 = vmatprep.mubr.f32.mxu0 0.0
    %1247 = vmatmul.mubr.f32.gmra.mrb[0].mxu0 %v1037
    %v1248 = vpop.f32.mrb[0].mxu0
    %v1249 = vadd.f32 %v1066, %v1248
    %v1250 = vpop.f32.mrb[0].mxu0
    %1251 = vmatprep.mubr.f32.mxu0 0.0
    %1252 = vmatmul.mubr.f32.gmra.mrb[0].mxu0 %v1038
    %v1253 = vpop.f32.mrb[0].mxu0
    %v1254 = vadd.f32 %v1066, %v1253
    %v1255 = vpop.f32.mrb[0].mxu0
    %1256 = vmatprep.mubr.f32.mxu0 0.0
    %1257 = vmatmul.mubr.f32.gmra.mrb[0].mxu0 %v1039
    %v1258 = vpop.f32.mrb[0].mxu0
    %v1259 = vadd.f32 %v1066, %v1258
    %v1260 = vpop.f32.mrb[0].mxu0
    %1261 = vmatprep.mubr.f32.mxu0 0.0
    %1262 = vmatmul.mubr.f32.gmra.mrb[0].mxu0 %v1040
    %v1263 = vpop.f32.mrb[0].mxu0
    %v1264 = vadd.f32 %v1066, %v1263
    %v1265 = vpop.f32.mrb[0].mxu0
    %1266 = vmatprep.mubr.f32.mxu0 0.0
    %1267 = vmatmul.mubr.f32.gmra.mrb[0].mxu0 %v1041
    %v1268 = vpop.f32.mrb[0].mxu0
    %v1269 = vadd.f32 %v1066, %v1268
    %v1270 = vpop.f32.mrb[0].mxu0
    %1271 = vmatprep.mubr.f32.mxu0 0.0
    %1272 = vmatmul.mubr.f32.gmra.mrb[0].mxu0 %v1042
    %v1273 = vpop.f32.mrb[0].mxu0
    %v1274 = vadd.f32 %v1066, %v1273
    %v1275 = vpop.f32.mrb[0].mxu0
    %1276 = vmatprep.mubr.f32.mxu0 0.0
    %1277 = vmatmul.mubr.f32.gmra.mrb[0].mxu0 %v1043
    %v1278 = vpop.f32.mrb[0].mxu0
    %v1279 = vadd.f32 %v1066, %v1278
    %v1280 = vpop.f32.mrb[0].mxu0
    %1281 = vmatprep.mubr.f32.mxu0 0.0
    %1282 = vmatmul.mubr.f32.gmra.mrb[0].mxu0 %v1044
    %v1283 = vpop.f32.mrb[0].mxu0
    %v1284 = vadd.f32 %v1066, %v1283
    %v1285 = vpop.f32.mrb[0].mxu0
    %1286 = vmatprep.mubr.f32.mxu0 0.0
    %1287 = vmatmul.mubr.f32.gmra.mrb[0].mxu0 %v1045
    %v1288 = vpop.f32.mrb[0].mxu0
    %v1289 = vadd.f32 %v1066, %v1288
    %v1290 = vpop.f32.mrb[0].mxu0
    %1291 = vdwg.mxu0
    %v1292 = vld [vmem:[#allocation2 + $0x6] sm:$0x1]
    %v1293 = vld [vmem:[#allocation2 + $0x7] sm:$0x1]
    %1294 = vadd.xlane.f32.xlu0 %v1134
    %v1295 = vpop.xlane.xlu0 %1294
    %1296 = vadd.xlane.f32.xlu0 %v1139
    %v1297 = vpop.xlane.xlu0 %1296
    %1298 = vadd.xlane.f32.xlu0 %v1144
    %v1299 = vpop.xlane.xlu0 %1298
    %1300 = vadd.xlane.f32.xlu0 %v1149
    %v1301 = vpop.xlane.xlu0 %1300
    %1302 = vadd.xlane.f32.xlu0 %v1154
    %v1303 = vpop.xlane.xlu0 %1302
    %1304 = vadd.xlane.f32.xlu0 %v1159
    %v1305 = vpop.xlane.xlu0 %1304
    %1306 = vadd.xlane.f32.xlu0 %v1164
    %v1307 = vpop.xlane.xlu0 %1306
    %1308 = vadd.xlane.f32.xlu0 %v1169
    %v1309 = vpop.xlane.xlu0 %1308
    %1310 = vadd.xlane.f32.xlu0 %v1174
    %v1311 = vpop.xlane.xlu0 %1310
    %1312 = vadd.xlane.f32.xlu0 %v1179
    %v1313 = vpop.xlane.xlu0 %1312
    %1314 = vadd.xlane.f32.xlu0 %v1184
    %v1315 = vpop.xlane.xlu0 %1314
    %1316 = vadd.xlane.f32.xlu0 %v1189
    %v1317 = vpop.xlane.xlu0 %1316
    %1318 = vadd.xlane.f32.xlu0 %v1194
    %v1319 = vpop.xlane.xlu0 %1318
    %1320 = vadd.xlane.f32.xlu0 %v1199
    %v1321 = vpop.xlane.xlu0 %1320
    %1322 = vadd.xlane.f32.xlu0 %v1204
    %v1323 = vpop.xlane.xlu0 %1322
    %1324 = vadd.xlane.f32.xlu0 %v1209
    %v1325 = vpop.xlane.xlu0 %1324
    %1326 = vadd.xlane.f32.xlu0 %v1214
    %v1327 = vpop.xlane.xlu0 %1326
    %1328 = vadd.xlane.f32.xlu0 %v1219
    %v1329 = vpop.xlane.xlu0 %1328
    %1330 = vadd.xlane.f32.xlu0 %v1224
    %v1331 = vpop.xlane.xlu0 %1330
    %1332 = vadd.xlane.f32.xlu0 %v1229
    %v1333 = vpop.xlane.xlu0 %1332
    %1334 = vadd.xlane.f32.xlu0 %v1234
    %v1335 = vpop.xlane.xlu0 %1334
    %1336 = vadd.xlane.f32.xlu0 %v1239
    %v1337 = vpop.xlane.xlu0 %1336
    %1338 = vadd.xlane.f32.xlu0 %v1244
    %v1339 = vpop.xlane.xlu0 %1338
    %1340 = vadd.xlane.f32.xlu0 %v1249
    %v1341 = vpop.xlane.xlu0 %1340
    %1342 = vadd.xlane.f32.xlu0 %v1254
    %v1343 = vpop.xlane.xlu0 %1342
    %1344 = vadd.xlane.f32.xlu0 %v1259
    %v1345 = vpop.xlane.xlu0 %1344
    %1346 = vadd.xlane.f32.xlu0 %v1264
    %v1347 = vpop.xlane.xlu0 %1346
    %1348 = vadd.xlane.f32.xlu0 %v1269
    %v1349 = vpop.xlane.xlu0 %1348
    %1350 = vadd.xlane.f32.xlu0 %v1274
    %v1351 = vpop.xlane.xlu0 %1350
    %1352 = vadd.xlane.f32.xlu0 %v1279
    %v1353 = vpop.xlane.xlu0 %1352
    %1354 = vadd.xlane.f32.xlu0 %v1284
    %v1355 = vpop.xlane.xlu0 %1354
    %1356 = vadd.xlane.f32.xlu0 %v1289
    %v1357 = vpop.xlane.xlu0 %1356
    %v1358 = vmul.f32 %v1295, 0.03125
    %v1359 = vmul.f32 %v1297, 0.03125
    %v1360 = vmul.f32 %v1299, 0.03125
    %v1361 = vmul.f32 %v1301, 0.03125
    %v1362 = vmul.f32 %v1303, 0.03125
    %v1363 = vmul.f32 %v1305, 0.03125
    %v1364 = vmul.f32 %v1307, 0.03125
    %v1365 = vmul.f32 %v1309, 0.03125
    %v1366 = vmul.f32 %v1311, 0.03125
    %v1367 = vmul.f32 %v1313, 0.03125
    %v1368 = vmul.f32 %v1315, 0.03125
    %v1369 = vmul.f32 %v1317, 0.03125
    %v1370 = vmul.f32 %v1319, 0.03125
    %v1371 = vmul.f32 %v1321, 0.03125
    %v1372 = vmul.f32 %v1323, 0.03125
    %v1373 = vmul.f32 %v1325, 0.03125
    %v1374 = vmul.f32 %v1327, 0.03125
    %v1375 = vmul.f32 %v1329, 0.03125
    %v1376 = vmul.f32 %v1331, 0.03125
    %v1377 = vmul.f32 %v1333, 0.03125
    %v1378 = vmul.f32 %v1335, 0.03125
    %v1379 = vmul.f32 %v1337, 0.03125
    %v1380 = vmul.f32 %v1339, 0.03125
    %v1381 = vmul.f32 %v1341, 0.03125
    %v1382 = vmul.f32 %v1343, 0.03125
    %v1383 = vmul.f32 %v1345, 0.03125
    %v1384 = vmul.f32 %v1347, 0.03125
    %v1385 = vmul.f32 %v1349, 0.03125
    %v1386 = vmul.f32 %v1351, 0.03125
    %v1387 = vmul.f32 %v1353, 0.03125
    %v1388 = vmul.f32 %v1355, 0.03125
    %v1389 = vmul.f32 %v1357, 0.03125
    %v1390 = vmul.f32 %v1134, %v1134
    %v1391 = vmul.f32 %v1139, %v1139
    %v1392 = vmul.f32 %v1144, %v1144
    %v1393 = vmul.f32 %v1149, %v1149
    %v1394 = vmul.f32 %v1154, %v1154
    %v1395 = vmul.f32 %v1159, %v1159
    %v1396 = vmul.f32 %v1164, %v1164
    %v1397 = vmul.f32 %v1169, %v1169
    %v1398 = vmul.f32 %v1174, %v1174
    %v1399 = vmul.f32 %v1179, %v1179
    %v1400 = vmul.f32 %v1184, %v1184
    %v1401 = vmul.f32 %v1189, %v1189
    %v1402 = vmul.f32 %v1194, %v1194
    %v1403 = vmul.f32 %v1199, %v1199
    %v1404 = vmul.f32 %v1204, %v1204
    %v1405 = vmul.f32 %v1209, %v1209
    %v1406 = vmul.f32 %v1214, %v1214
    %v1407 = vmul.f32 %v1219, %v1219
    %v1408 = vmul.f32 %v1224, %v1224
    %v1409 = vmul.f32 %v1229, %v1229
    %v1410 = vmul.f32 %v1234, %v1234
    %v1411 = vmul.f32 %v1239, %v1239
    %v1412 = vmul.f32 %v1244, %v1244
    %v1413 = vmul.f32 %v1249, %v1249
    %v1414 = vmul.f32 %v1254, %v1254
    %v1415 = vmul.f32 %v1259, %v1259
    %v1416 = vmul.f32 %v1264, %v1264
    %v1417 = vmul.f32 %v1269, %v1269
    %v1418 = vmul.f32 %v1274, %v1274
    %v1419 = vmul.f32 %v1279, %v1279
    %v1420 = vmul.f32 %v1284, %v1284
    %v1421 = vmul.f32 %v1289, %v1289
    %1422 = vadd.xlane.f32.xlu0 %v1390
    %v1423 = vpop.xlane.xlu0 %1422
    %1424 = vadd.xlane.f32.xlu0 %v1391
    %v1425 = vpop.xlane.xlu0 %1424
    %1426 = vadd.xlane.f32.xlu0 %v1392
    %v1427 = vpop.xlane.xlu0 %1426
    %1428 = vadd.xlane.f32.xlu0 %v1393
    %v1429 = vpop.xlane.xlu0 %1428
    %1430 = vadd.xlane.f32.xlu0 %v1394
    %v1431 = vpop.xlane.xlu0 %1430
    %1432 = vadd.xlane.f32.xlu0 %v1395
    %v1433 = vpop.xlane.xlu0 %1432
    %1434 = vadd.xlane.f32.xlu0 %v1396
    %v1435 = vpop.xlane.xlu0 %1434
    %1436 = vadd.xlane.f32.xlu0 %v1397
    %v1437 = vpop.xlane.xlu0 %1436
    %1438 = vadd.xlane.f32.xlu0 %v1398
    %v1439 = vpop.xlane.xlu0 %1438
    %1440 = vadd.xlane.f32.xlu0 %v1399
    %v1441 = vpop.xlane.xlu0 %1440
    %1442 = vadd.xlane.f32.xlu0 %v1400
    %v1443 = vpop.xlane.xlu0 %1442
    %1444 = vadd.xlane.f32.xlu0 %v1401
    %v1445 = vpop.xlane.xlu0 %1444
    %1446 = vadd.xlane.f32.xlu0 %v1402
    %v1447 = vpop.xlane.xlu0 %1446
    %1448 = vadd.xlane.f32.xlu0 %v1403
    %v1449 = vpop.xlane.xlu0 %1448
    %1450 = vadd.xlane.f32.xlu0 %v1404
    %v1451 = vpop.xlane.xlu0 %1450
    %1452 = vadd.xlane.f32.xlu0 %v1405
    %v1453 = vpop.xlane.xlu0 %1452
    %1454 = vadd.xlane.f32.xlu0 %v1406
    %v1455 = vpop.xlane.xlu0 %1454
    %1456 = vadd.xlane.f32.xlu0 %v1407
    %v1457 = vpop.xlane.xlu0 %1456
    %1458 = vadd.xlane.f32.xlu0 %v1408
    %v1459 = vpop.xlane.xlu0 %1458
    %1460 = vadd.xlane.f32.xlu0 %v1409
    %v1461 = vpop.xlane.xlu0 %1460
    %1462 = vadd.xlane.f32.xlu0 %v1410
    %v1463 = vpop.xlane.xlu0 %1462
    %1464 = vadd.xlane.f32.xlu0 %v1411
    %v1465 = vpop.xlane.xlu0 %1464
    %1466 = vadd.xlane.f32.xlu0 %v1412
    %v1467 = vpop.xlane.xlu0 %1466
    %1468 = vadd.xlane.f32.xlu0 %v1413
    %v1469 = vpop.xlane.xlu0 %1468
    %1470 = vadd.xlane.f32.xlu0 %v1414
    %v1471 = vpop.xlane.xlu0 %1470
    %1472 = vadd.xlane.f32.xlu0 %v1415
    %v1473 = vpop.xlane.xlu0 %1472
    %1474 = vadd.xlane.f32.xlu0 %v1416
    %v1475 = vpop.xlane.xlu0 %1474
    %1476 = vadd.xlane.f32.xlu0 %v1417
    %v1477 = vpop.xlane.xlu0 %1476
    %1478 = vadd.xlane.f32.xlu0 %v1418
    %v1479 = vpop.xlane.xlu0 %1478
    %1480 = vadd.xlane.f32.xlu0 %v1419
    %v1481 = vpop.xlane.xlu0 %1480
    %1482 = vadd.xlane.f32.xlu0 %v1420
    %v1483 = vpop.xlane.xlu0 %1482
    %1484 = vadd.xlane.f32.xlu0 %v1421
    %v1485 = vpop.xlane.xlu0 %1484
    %v1486 = vmul.f32 %v1423, 0.03125
    %v1487 = vmul.f32 %v1425, 0.03125
    %v1488 = vmul.f32 %v1427, 0.03125
    %v1489 = vmul.f32 %v1429, 0.03125
    %v1490 = vmul.f32 %v1431, 0.03125
    %v1491 = vmul.f32 %v1433, 0.03125
    %v1492 = vmul.f32 %v1435, 0.03125
    %v1493 = vmul.f32 %v1437, 0.03125
    %v1494 = vmul.f32 %v1439, 0.03125
    %v1495 = vmul.f32 %v1441, 0.03125
    %v1496 = vmul.f32 %v1443, 0.03125
    %v1497 = vmul.f32 %v1445, 0.03125
    %v1498 = vmul.f32 %v1447, 0.03125
    %v1499 = vmul.f32 %v1449, 0.03125
    %v1500 = vmul.f32 %v1451, 0.03125
    %v1501 = vmul.f32 %v1453, 0.03125
    %v1502 = vmul.f32 %v1455, 0.03125
    %v1503 = vmul.f32 %v1457, 0.03125
    %v1504 = vmul.f32 %v1459, 0.03125
    %v1505 = vmul.f32 %v1461, 0.03125
    %v1506 = vmul.f32 %v1463, 0.03125
    %v1507 = vmul.f32 %v1465, 0.03125
    %v1508 = vmul.f32 %v1467, 0.03125
    %v1509 = vmul.f32 %v1469, 0.03125
    %v1510 = vmul.f32 %v1471, 0.03125
    %v1511 = vmul.f32 %v1473, 0.03125
    %v1512 = vmul.f32 %v1475, 0.03125
    %v1513 = vmul.f32 %v1477, 0.03125
    %v1514 = vmul.f32 %v1479, 0.03125
    %v1515 = vmul.f32 %v1481, 0.03125
    %v1516 = vmul.f32 %v1483, 0.03125
    %v1517 = vmul.f32 %v1485, 0.03125
    %v1518 = vmul.f32 %v1358, %v1358
    %v1519 = vmul.f32 %v1359, %v1359
    %v1520 = vmul.f32 %v1360, %v1360
    %v1521 = vmul.f32 %v1361, %v1361
    %v1522 = vmul.f32 %v1362, %v1362
    %v1523 = vmul.f32 %v1363, %v1363
    %v1524 = vmul.f32 %v1364, %v1364
    %v1525 = vmul.f32 %v1365, %v1365
    %v1526 = vmul.f32 %v1366, %v1366
    %v1527 = vmul.f32 %v1367, %v1367
    %v1528 = vmul.f32 %v1368, %v1368
    %v1529 = vmul.f32 %v1369, %v1369
    %v1530 = vmul.f32 %v1370, %v1370
    %v1531 = vmul.f32 %v1371, %v1371
    %v1532 = vmul.f32 %v1372, %v1372
    %v1533 = vmul.f32 %v1373, %v1373
    %v1534 = vmul.f32 %v1374, %v1374
    %v1535 = vmul.f32 %v1375, %v1375
    %v1536 = vmul.f32 %v1376, %v1376
    %v1537 = vmul.f32 %v1377, %v1377
    %v1538 = vmul.f32 %v1378, %v1378
    %v1539 = vmul.f32 %v1379, %v1379
    %v1540 = vmul.f32 %v1380, %v1380
    %v1541 = vmul.f32 %v1381, %v1381
    %v1542 = vmul.f32 %v1382, %v1382
    %v1543 = vmul.f32 %v1383, %v1383
    %v1544 = vmul.f32 %v1384, %v1384
    %v1545 = vmul.f32 %v1385, %v1385
    %v1546 = vmul.f32 %v1386, %v1386
    %v1547 = vmul.f32 %v1387, %v1387
    %v1548 = vmul.f32 %v1388, %v1388
    %v1549 = vmul.f32 %v1389, %v1389
    %v1550 = vsub.f32 %v1486, %v1518
    %v1551 = vsub.f32 %v1487, %v1519
    %v1552 = vsub.f32 %v1488, %v1520
    %v1553 = vsub.f32 %v1489, %v1521
    %v1554 = vsub.f32 %v1490, %v1522
    %v1555 = vsub.f32 %v1491, %v1523
    %v1556 = vsub.f32 %v1492, %v1524
    %v1557 = vsub.f32 %v1493, %v1525
    %v1558 = vsub.f32 %v1494, %v1526
    %v1559 = vsub.f32 %v1495, %v1527
    %v1560 = vsub.f32 %v1496, %v1528
    %v1561 = vsub.f32 %v1497, %v1529
    %v1562 = vsub.f32 %v1498, %v1530
    %v1563 = vsub.f32 %v1499, %v1531
    %v1564 = vsub.f32 %v1500, %v1532
    %v1565 = vsub.f32 %v1501, %v1533
    %v1566 = vsub.f32 %v1502, %v1534
    %v1567 = vsub.f32 %v1503, %v1535
    %v1568 = vsub.f32 %v1504, %v1536
    %v1569 = vsub.f32 %v1505, %v1537
    %v1570 = vsub.f32 %v1506, %v1538
    %v1571 = vsub.f32 %v1507, %v1539
    %v1572 = vsub.f32 %v1508, %v1540
    %v1573 = vsub.f32 %v1509, %v1541
    %v1574 = vsub.f32 %v1510, %v1542
    %v1575 = vsub.f32 %v1511, %v1543
    %v1576 = vsub.f32 %v1512, %v1544
    %v1577 = vsub.f32 %v1513, %v1545
    %v1578 = vsub.f32 %v1514, %v1546
    %v1579 = vsub.f32 %v1515, %v1547
    %v1580 = vsub.f32 %v1516, %v1548
    %v1581 = vsub.f32 %v1517, %v1549
    %v1582 = vmax.f32 %v1550, 0.0
    %v1583 = vmax.f32 %v1551, 0.0
    %v1584 = vmax.f32 %v1552, 0.0
    %v1585 = vmax.f32 %v1553, 0.0
    %v1586 = vmax.f32 %v1554, 0.0
    %v1587 = vmax.f32 %v1555, 0.0
    %v1588 = vmax.f32 %v1556, 0.0
    %v1589 = vmax.f32 %v1557, 0.0
    %v1590 = vmax.f32 %v1558, 0.0
    %v1591 = vmax.f32 %v1559, 0.0
    %v1592 = vmax.f32 %v1560, 0.0
    %v1593 = vmax.f32 %v1561, 0.0
    %v1594 = vmax.f32 %v1562, 0.0
    %v1595 = vmax.f32 %v1563, 0.0
    %v1596 = vmax.f32 %v1564, 0.0
    %v1597 = vmax.f32 %v1565, 0.0
    %v1598 = vmax.f32 %v1566, 0.0
    %v1599 = vmax.f32 %v1567, 0.0
    %v1600 = vmax.f32 %v1568, 0.0
    %v1601 = vmax.f32 %v1569, 0.0
    %v1602 = vmax.f32 %v1570, 0.0
    %v1603 = vmax.f32 %v1571, 0.0
    %v1604 = vmax.f32 %v1572, 0.0
    %v1605 = vmax.f32 %v1573, 0.0
    %v1606 = vmax.f32 %v1574, 0.0
    %v1607 = vmax.f32 %v1575, 0.0
    %v1608 = vmax.f32 %v1576, 0.0
    %v1609 = vmax.f32 %v1577, 0.0
    %v1610 = vmax.f32 %v1578, 0.0
    %v1611 = vmax.f32 %v1579, 0.0
    %v1612 = vmax.f32 %v1580, 0.0
    %v1613 = vmax.f32 %v1581, 0.0
    %v1614 = vsub.f32 %v1134, %v1358
    %v1615 = vsub.f32 %v1139, %v1359
    %v1616 = vsub.f32 %v1144, %v1360
    %v1617 = vsub.f32 %v1149, %v1361
    %v1618 = vsub.f32 %v1154, %v1362
    %v1619 = vsub.f32 %v1159, %v1363
    %v1620 = vsub.f32 %v1164, %v1364
    %v1621 = vsub.f32 %v1169, %v1365
    %v1622 = vsub.f32 %v1174, %v1366
    %v1623 = vsub.f32 %v1179, %v1367
    %v1624 = vsub.f32 %v1184, %v1368
    %v1625 = vsub.f32 %v1189, %v1369
    %v1626 = vsub.f32 %v1194, %v1370
    %v1627 = vsub.f32 %v1199, %v1371
    %v1628 = vsub.f32 %v1204, %v1372
    %v1629 = vsub.f32 %v1209, %v1373
    %v1630 = vsub.f32 %v1214, %v1374
    %v1631 = vsub.f32 %v1219, %v1375
    %v1632 = vsub.f32 %v1224, %v1376
    %v1633 = vsub.f32 %v1229, %v1377
    %v1634 = vsub.f32 %v1234, %v1378
    %v1635 = vsub.f32 %v1239, %v1379
    %v1636 = vsub.f32 %v1244, %v1380
    %v1637 = vsub.f32 %v1249, %v1381
    %v1638 = vsub.f32 %v1254, %v1382
    %v1639 = vsub.f32 %v1259, %v1383
    %v1640 = vsub.f32 %v1264, %v1384
    %v1641 = vsub.f32 %v1269, %v1385
    %v1642 = vsub.f32 %v1274, %v1386
    %v1643 = vsub.f32 %v1279, %v1387
    %v1644 = vsub.f32 %v1284, %v1388
    %v1645 = vsub.f32 %v1289, %v1389
    %v1646 = vadd.f32 %v1582, 1e-05
    %v1647 = vadd.f32 %v1583, 1e-05
    %v1648 = vadd.f32 %v1584, 1e-05
    %v1649 = vadd.f32 %v1585, 1e-05
    %v1650 = vadd.f32 %v1586, 1e-05
    %v1651 = vadd.f32 %v1587, 1e-05
    %v1652 = vadd.f32 %v1588, 1e-05
    %v1653 = vadd.f32 %v1589, 1e-05
    %v1654 = vadd.f32 %v1590, 1e-05
    %v1655 = vadd.f32 %v1591, 1e-05
    %v1656 = vadd.f32 %v1592, 1e-05
    %v1657 = vadd.f32 %v1593, 1e-05
    %v1658 = vadd.f32 %v1594, 1e-05
    %v1659 = vadd.f32 %v1595, 1e-05
    %v1660 = vadd.f32 %v1596, 1e-05
    %v1661 = vadd.f32 %v1597, 1e-05
    %v1662 = vadd.f32 %v1598, 1e-05
    %v1663 = vadd.f32 %v1599, 1e-05
    %v1664 = vadd.f32 %v1600, 1e-05
    %v1665 = vadd.f32 %v1601, 1e-05
    %v1666 = vadd.f32 %v1602, 1e-05
    %v1667 = vadd.f32 %v1603, 1e-05
    %v1668 = vadd.f32 %v1604, 1e-05
    %v1669 = vadd.f32 %v1605, 1e-05
    %v1670 = vadd.f32 %v1606, 1e-05
    %v1671 = vadd.f32 %v1607, 1e-05
    %v1672 = vadd.f32 %v1608, 1e-05
    %v1673 = vadd.f32 %v1609, 1e-05
    %v1674 = vadd.f32 %v1610, 1e-05
    %v1675 = vadd.f32 %v1611, 1e-05
    %v1676 = vadd.f32 %v1612, 1e-05
    %v1677 = vadd.f32 %v1613, 1e-05
    %v1678 = vrsqrt.pop %v1646
    %v1679 = vrsqrt.pop %v1647
    %v1680 = vrsqrt.pop %v1648
    %v1681 = vrsqrt.pop %v1649
    %v1682 = vrsqrt.pop %v1650
    %v1683 = vrsqrt.pop %v1651
    %v1684 = vrsqrt.pop %v1652
    %v1685 = vrsqrt.pop %v1653
    %v1686 = vrsqrt.pop %v1654
    %v1687 = vrsqrt.pop %v1655
    %v1688 = vrsqrt.pop %v1656
    %v1689 = vrsqrt.pop %v1657
    %v1690 = vrsqrt.pop %v1658
    %v1691 = vrsqrt.pop %v1659
    %v1692 = vrsqrt.pop %v1660
    %v1693 = vrsqrt.pop %v1661
    %v1694 = vrsqrt.pop %v1662
    %v1695 = vrsqrt.pop %v1663
    %v1696 = vrsqrt.pop %v1664
    %v1697 = vrsqrt.pop %v1665
    %v1698 = vrsqrt.pop %v1666
    %v1699 = vrsqrt.pop %v1667
    %v1700 = vrsqrt.pop %v1668
    %v1701 = vrsqrt.pop %v1669
    %v1702 = vrsqrt.pop %v1670
    %v1703 = vrsqrt.pop %v1671
    %v1704 = vrsqrt.pop %v1672
    %v1705 = vrsqrt.pop %v1673
    %v1706 = vrsqrt.pop %v1674
    %v1707 = vrsqrt.pop %v1675
    %v1708 = vrsqrt.pop %v1676
    %v1709 = vrsqrt.pop %v1677
    %v1710 = vmul.f32 %v1614, %v1678
    %v1711 = vmul.f32 %v1615, %v1679
    %v1712 = vmul.f32 %v1616, %v1680
    %v1713 = vmul.f32 %v1617, %v1681
    %v1714 = vmul.f32 %v1618, %v1682
    %v1715 = vmul.f32 %v1619, %v1683
    %v1716 = vmul.f32 %v1620, %v1684
    %v1717 = vmul.f32 %v1621, %v1685
    %v1718 = vmul.f32 %v1622, %v1686
    %v1719 = vmul.f32 %v1623, %v1687
    %v1720 = vmul.f32 %v1624, %v1688
    %v1721 = vmul.f32 %v1625, %v1689
    %v1722 = vmul.f32 %v1626, %v1690
    %v1723 = vmul.f32 %v1627, %v1691
    %v1724 = vmul.f32 %v1628, %v1692
    %v1725 = vmul.f32 %v1629, %v1693
    %v1726 = vmul.f32 %v1630, %v1694
    %v1727 = vmul.f32 %v1631, %v1695
    %v1728 = vmul.f32 %v1632, %v1696
    %v1729 = vmul.f32 %v1633, %v1697
    %v1730 = vmul.f32 %v1634, %v1698
    %v1731 = vmul.f32 %v1635, %v1699
    %v1732 = vmul.f32 %v1636, %v1700
    %v1733 = vmul.f32 %v1637, %v1701
    %v1734 = vmul.f32 %v1638, %v1702
    %v1735 = vmul.f32 %v1639, %v1703
    %v1736 = vmul.f32 %v1640, %v1704
    %v1737 = vmul.f32 %v1641, %v1705
    %v1738 = vmul.f32 %v1642, %v1706
    %v1739 = vmul.f32 %v1643, %v1707
    %v1740 = vmul.f32 %v1644, %v1708
    %v1741 = vmul.f32 %v1645, %v1709
    %v1742 = vlaneseq
    %v1743 = vshrl.u32 %v1742, 7
    %v1744 = vsub.s32 0, %v1743
    %v1745 = vrot.slane %v1292, %v1744
    %v1746 = vmul.f32 %v1710, %v1745
    %v1747 = vmul.f32 %v1711, %v1745
    %v1748 = vmul.f32 %v1712, %v1745
    %v1749 = vmul.f32 %v1713, %v1745
    %v1750 = vmul.f32 %v1714, %v1745
    %v1751 = vmul.f32 %v1715, %v1745
    %v1752 = vmul.f32 %v1716, %v1745
    %v1753 = vmul.f32 %v1717, %v1745
    %v1754 = vmul.f32 %v1718, %v1745
    %v1755 = vmul.f32 %v1719, %v1745
    %v1756 = vmul.f32 %v1720, %v1745
    %v1757 = vmul.f32 %v1721, %v1745
    %v1758 = vmul.f32 %v1722, %v1745
    %v1759 = vmul.f32 %v1723, %v1745
    %v1760 = vmul.f32 %v1724, %v1745
    %v1761 = vmul.f32 %v1725, %v1745
    %v1762 = vmul.f32 %v1726, %v1745
    %v1763 = vmul.f32 %v1727, %v1745
    %v1764 = vmul.f32 %v1728, %v1745
    %v1765 = vmul.f32 %v1729, %v1745
    %v1766 = vmul.f32 %v1730, %v1745
    %v1767 = vmul.f32 %v1731, %v1745
    %v1768 = vmul.f32 %v1732, %v1745
    %v1769 = vmul.f32 %v1733, %v1745
    %v1770 = vmul.f32 %v1734, %v1745
    %v1771 = vmul.f32 %v1735, %v1745
    %v1772 = vmul.f32 %v1736, %v1745
    %v1773 = vmul.f32 %v1737, %v1745
    %v1774 = vmul.f32 %v1738, %v1745
    %v1775 = vmul.f32 %v1739, %v1745
    %v1776 = vmul.f32 %v1740, %v1745
    %v1777 = vmul.f32 %v1741, %v1745
    %v1778 = vlaneseq
    %v1779 = vshrl.u32 %v1778, 7
    %v1780 = vsub.s32 0, %v1779
    %v1781 = vrot.slane %v1293, %v1780
    %v1782 = vadd.f32 %v1746, %v1781
    %v1783 = vadd.f32 %v1747, %v1781
    %v1784 = vadd.f32 %v1748, %v1781
    %v1785 = vadd.f32 %v1749, %v1781
    %v1786 = vadd.f32 %v1750, %v1781
    %v1787 = vadd.f32 %v1751, %v1781
    %v1788 = vadd.f32 %v1752, %v1781
    %v1789 = vadd.f32 %v1753, %v1781
    %v1790 = vadd.f32 %v1754, %v1781
    %v1791 = vadd.f32 %v1755, %v1781
    %v1792 = vadd.f32 %v1756, %v1781
    %v1793 = vadd.f32 %v1757, %v1781
    %v1794 = vadd.f32 %v1758, %v1781
    %v1795 = vadd.f32 %v1759, %v1781
    %v1796 = vadd.f32 %v1760, %v1781
    %v1797 = vadd.f32 %v1761, %v1781
    %v1798 = vadd.f32 %v1762, %v1781
    %v1799 = vadd.f32 %v1763, %v1781
    %v1800 = vadd.f32 %v1764, %v1781
    %v1801 = vadd.f32 %v1765, %v1781
    %v1802 = vadd.f32 %v1766, %v1781
    %v1803 = vadd.f32 %v1767, %v1781
    %v1804 = vadd.f32 %v1768, %v1781
    %v1805 = vadd.f32 %v1769, %v1781
    %v1806 = vadd.f32 %v1770, %v1781
    %v1807 = vadd.f32 %v1771, %v1781
    %v1808 = vadd.f32 %v1772, %v1781
    %v1809 = vadd.f32 %v1773, %v1781
    %v1810 = vadd.f32 %v1774, %v1781
    %v1811 = vadd.f32 %v1775, %v1781
    %v1812 = vadd.f32 %v1776, %v1781
    %v1813 = vadd.f32 %v1777, %v1781
    %v1814 = vmax.f32 %v1782, 0.0
    %v1815 = vmax.f32 %v1783, 0.0
    %v1816 = vmax.f32 %v1784, 0.0
    %v1817 = vmax.f32 %v1785, 0.0
    %v1818 = vmax.f32 %v1786, 0.0
    %v1819 = vmax.f32 %v1787, 0.0
    %v1820 = vmax.f32 %v1788, 0.0
    %v1821 = vmax.f32 %v1789, 0.0
    %v1822 = vmax.f32 %v1790, 0.0
    %v1823 = vmax.f32 %v1791, 0.0
    %v1824 = vmax.f32 %v1792, 0.0
    %v1825 = vmax.f32 %v1793, 0.0
    %v1826 = vmax.f32 %v1794, 0.0
    %v1827 = vmax.f32 %v1795, 0.0
    %v1828 = vmax.f32 %v1796, 0.0
    %v1829 = vmax.f32 %v1797, 0.0
    %v1830 = vmax.f32 %v1798, 0.0
    %v1831 = vmax.f32 %v1799, 0.0
    %v1832 = vmax.f32 %v1800, 0.0
    %v1833 = vmax.f32 %v1801, 0.0
    %v1834 = vmax.f32 %v1802, 0.0
    %v1835 = vmax.f32 %v1803, 0.0
    %v1836 = vmax.f32 %v1804, 0.0
    %v1837 = vmax.f32 %v1805, 0.0
    %v1838 = vmax.f32 %v1806, 0.0
    %v1839 = vmax.f32 %v1807, 0.0
    %v1840 = vmax.f32 %v1808, 0.0
    %v1841 = vmax.f32 %v1809, 0.0
    %v1842 = vmax.f32 %v1810, 0.0
    %v1843 = vmax.f32 %v1811, 0.0
    %v1844 = vmax.f32 %v1812, 0.0
    %v1845 = vmax.f32 %v1813, 0.0
    %s1846 = scalar_lea.vmem %s1, 128
    %v1847 = vld [vmem:[%s1846] sm:$0xff]
    %v1848 = vld [vmem:[%s1846 + $0x8] sm:$0xff]
    %v1849 = vld [vmem:[%s1846 + $0x10] sm:$0xff]
    %v1850 = vld [vmem:[%s1846 + $0x18] sm:$0xff]
    %v1851 = vld [vmem:[%s1846 + $0x20] sm:$0xff]
    %v1852 = vld [vmem:[%s1846 + $0x28] sm:$0xff]
    %v1853 = vld [vmem:[%s1846 + $0x30] sm:$0xff]
    %v1854 = vld [vmem:[%s1846 + $0x38] sm:$0xff]
    %v1855 = vld [vmem:[%s1846 + $0x40] sm:$0xff]
    %v1856 = vld [vmem:[%s1846 + $0x48] sm:$0xff]
    %v1857 = vld [vmem:[%s1846 + $0x50] sm:$0xff]
    %v1858 = vld [vmem:[%s1846 + $0x58] sm:$0xff]
    %v1859 = vld [vmem:[%s1846 + $0x60] sm:$0xff]
    %v1860 = vld [vmem:[%s1846 + $0x68] sm:$0xff]
    %v1861 = vld [vmem:[%s1846 + $0x70] sm:$0xff]
    %v1862 = vld [vmem:[%s1846 + $0x78] sm:$0xff]
    %v1863 = vld [vmem:[#allocation2 + $0x8] sm:$0x1]
    %v1864 = vlaneseq
    %v1865 = vshrl.u32 %v1864, 7
    %v1866 = vsub.s32 0, %v1865
    %v1867 = vrot.slane %v1863, %v1866
    %1868 = vmatprep.subr.mxu0 0.0
    %1869 = vmatpush1.msra.mxu0 %v1847
    %1870 = vmatprep.subr.mxu0 0.0
    %1871 = vmatpush1.msra.mxu0 %v1848
    %1872 = vmatprep.subr.mxu0 0.0
    %1873 = vmatpush1.msra.mxu0 %v1849
    %1874 = vmatprep.subr.mxu0 0.0
    %1875 = vmatpush1.msra.mxu0 %v1850
    %1876 = vmatprep.subr.mxu0 0.0
    %1877 = vmatpush1.msra.mxu0 %v1851
    %1878 = vmatprep.subr.mxu0 0.0
    %1879 = vmatpush1.msra.mxu0 %v1852
    %1880 = vmatprep.subr.mxu0 0.0
    %1881 = vmatpush1.msra.mxu0 %v1853
    %1882 = vmatprep.subr.mxu0 0.0
    %1883 = vmatpush1.msra.mxu0 %v1854
    %1884 = vmatprep.subr.mxu0 0.0
    %1885 = vmatpush1.msra.mxu0 %v1855
    %1886 = vmatprep.subr.mxu0 0.0
    %1887 = vmatpush1.msra.mxu0 %v1856
    %1888 = vmatprep.subr.mxu0 0.0
    %1889 = vmatpush1.msra.mxu0 %v1857
    %1890 = vmatprep.subr.mxu0 0.0
    %1891 = vmatpush1.msra.mxu0 %v1858
    %1892 = vmatprep.subr.mxu0 0.0
    %1893 = vmatpush1.msra.mxu0 %v1859
    %1894 = vmatprep.subr.mxu0 0.0
    %1895 = vmatpush1.msra.mxu0 %v1860
    %1896 = vmatprep.subr.mxu0 0.0
    %1897 = vmatpush1.msra.mxu0 %v1861
    %1898 = vmatprep.subr.mxu0 0.0
    %1899 = vmatpush1.msra.mxu0 %v1862
    %1900 = vmatprep.subr.mxu0 0.0
    %1901 = vmatpush1.msra.mxu0 0.0
    %1902 = vmatprep.subr.mxu0 0.0
    %1903 = vmatpush1.msra.mxu0 0.0
    %1904 = vmatprep.subr.mxu0 0.0
    %1905 = vmatpush1.msra.mxu0 0.0
    %1906 = vmatprep.subr.mxu0 0.0
    %1907 = vmatpush1.msra.mxu0 0.0
    %1908 = vmatprep.subr.mxu0 0.0
    %1909 = vmatpush1.msra.mxu0 0.0
    %1910 = vmatprep.subr.mxu0 0.0
    %1911 = vmatpush1.msra.mxu0 0.0
    %1912 = vmatprep.subr.mxu0 0.0
    %1913 = vmatpush1.msra.mxu0 0.0
    %1914 = vmatprep.subr.mxu0 0.0
    %1915 = vmatpush1.msra.mxu0 0.0
    %1916 = vmatprep.subr.mxu0 0.0
    %1917 = vmatpush1.msra.mxu0 0.0
    %1918 = vmatprep.subr.mxu0 0.0
    %1919 = vmatpush1.msra.mxu0 0.0
    %1920 = vmatprep.subr.mxu0 0.0
    %1921 = vmatpush1.msra.mxu0 0.0
    %1922 = vmatprep.subr.mxu0 0.0
    %1923 = vmatpush1.msra.mxu0 0.0
    %1924 = vmatprep.subr.mxu0 0.0
    %1925 = vmatpush1.msra.mxu0 0.0
    %1926 = vmatprep.subr.mxu0 0.0
    %1927 = vmatpush1.msra.mxu0 0.0
    %1928 = vmatprep.subr.mxu0 0.0
    %1929 = vmatpush1.msra.mxu0 0.0
    %1930 = vmatprep.subr.mxu0 0.0
    %1931 = vmatpush1.msra.mxu0 0.0
    %1932 = vmatprep.mubr.f32.mxu0 0.0
    %1933 = vmatmul.mubr.f32.gmra.mrb[0].mxu0 %v1814
    %v1934 = vpop.f32.mrb[0].mxu0
    %v1935 = vadd.f32 %v1867, %v1934
    %v1936 = vpop.f32.mrb[0].mxu0
    %1937 = vmatprep.mubr.f32.mxu0 0.0
    %1938 = vmatmul.mubr.f32.gmra.mrb[0].mxu0 %v1815
    %v1939 = vpop.f32.mrb[0].mxu0
    %v1940 = vadd.f32 %v1867, %v1939
    %v1941 = vpop.f32.mrb[0].mxu0
    %1942 = vmatprep.mubr.f32.mxu0 0.0
    %1943 = vmatmul.mubr.f32.gmra.mrb[0].mxu0 %v1816
    %v1944 = vpop.f32.mrb[0].mxu0
    %v1945 = vadd.f32 %v1867, %v1944
    %v1946 = vpop.f32.mrb[0].mxu0
    %1947 = vmatprep.mubr.f32.mxu0 0.0
    %1948 = vmatmul.mubr.f32.gmra.mrb[0].mxu0 %v1817
    %v1949 = vpop.f32.mrb[0].mxu0
    %v1950 = vadd.f32 %v1867, %v1949
    %v1951 = vpop.f32.mrb[0].mxu0
    %1952 = vmatprep.mubr.f32.mxu0 0.0
    %1953 = vmatmul.mubr.f32.gmra.mrb[0].mxu0 %v1818
    %v1954 = vpop.f32.mrb[0].mxu0
    %v1955 = vadd.f32 %v1867, %v1954
    %v1956 = vpop.f32.mrb[0].mxu0
    %1957 = vmatprep.mubr.f32.mxu0 0.0
    %1958 = vmatmul.mubr.f32.gmra.mrb[0].mxu0 %v1819
    %v1959 = vpop.f32.mrb[0].mxu0
    %v1960 = vadd.f32 %v1867, %v1959
    %v1961 = vpop.f32.mrb[0].mxu0
    %1962 = vmatprep.mubr.f32.mxu0 0.0
    %1963 = vmatmul.mubr.f32.gmra.mrb[0].mxu0 %v1820
    %v1964 = vpop.f32.mrb[0].mxu0
    %v1965 = vadd.f32 %v1867, %v1964
    %v1966 = vpop.f32.mrb[0].mxu0
    %1967 = vmatprep.mubr.f32.mxu0 0.0
    %1968 = vmatmul.mubr.f32.gmra.mrb[0].mxu0 %v1821
    %v1969 = vpop.f32.mrb[0].mxu0
    %v1970 = vadd.f32 %v1867, %v1969
    %v1971 = vpop.f32.mrb[0].mxu0
    %1972 = vmatprep.mubr.f32.mxu0 0.0
    %1973 = vmatmul.mubr.f32.gmra.mrb[0].mxu0 %v1822
    %v1974 = vpop.f32.mrb[0].mxu0
    %v1975 = vadd.f32 %v1867, %v1974
    %v1976 = vpop.f32.mrb[0].mxu0
    %1977 = vmatprep.mubr.f32.mxu0 0.0
    %1978 = vmatmul.mubr.f32.gmra.mrb[0].mxu0 %v1823
    %v1979 = vpop.f32.mrb[0].mxu0
    %v1980 = vadd.f32 %v1867, %v1979
    %v1981 = vpop.f32.mrb[0].mxu0
    %1982 = vmatprep.mubr.f32.mxu0 0.0
    %1983 = vmatmul.mubr.f32.gmra.mrb[0].mxu0 %v1824
    %v1984 = vpop.f32.mrb[0].mxu0
    %v1985 = vadd.f32 %v1867, %v1984
    %v1986 = vpop.f32.mrb[0].mxu0
    %1987 = vmatprep.mubr.f32.mxu0 0.0
    %1988 = vmatmul.mubr.f32.gmra.mrb[0].mxu0 %v1825
    %v1989 = vpop.f32.mrb[0].mxu0
    %v1990 = vadd.f32 %v1867, %v1989
    %v1991 = vpop.f32.mrb[0].mxu0
    %1992 = vmatprep.mubr.f32.mxu0 0.0
    %1993 = vmatmul.mubr.f32.gmra.mrb[0].mxu0 %v1826
    %v1994 = vpop.f32.mrb[0].mxu0
    %v1995 = vadd.f32 %v1867, %v1994
    %v1996 = vpop.f32.mrb[0].mxu0
    %1997 = vmatprep.mubr.f32.mxu0 0.0
    %1998 = vmatmul.mubr.f32.gmra.mrb[0].mxu0 %v1827
    %v1999 = vpop.f32.mrb[0].mxu0
    %v2000 = vadd.f32 %v1867, %v1999
    %v2001 = vpop.f32.mrb[0].mxu0
    %2002 = vmatprep.mubr.f32.mxu0 0.0
    %2003 = vmatmul.mubr.f32.gmra.mrb[0].mxu0 %v1828
    %v2004 = vpop.f32.mrb[0].mxu0
    %v2005 = vadd.f32 %v1867, %v2004
    %v2006 = vpop.f32.mrb[0].mxu0
    %2007 = vmatprep.mubr.f32.mxu0 0.0
    %2008 = vmatmul.mubr.f32.gmra.mrb[0].mxu0 %v1829
    %v2009 = vpop.f32.mrb[0].mxu0
    %v2010 = vadd.f32 %v1867, %v2009
    %v2011 = vpop.f32.mrb[0].mxu0
    %2012 = vmatprep.mubr.f32.mxu0 0.0
    %2013 = vmatmul.mubr.f32.gmra.mrb[0].mxu0 %v1830
    %v2014 = vpop.f32.mrb[0].mxu0
    %v2015 = vadd.f32 %v1867, %v2014
    %v2016 = vpop.f32.mrb[0].mxu0
    %2017 = vmatprep.mubr.f32.mxu0 0.0
    %2018 = vmatmul.mubr.f32.gmra.mrb[0].mxu0 %v1831
    %v2019 = vpop.f32.mrb[0].mxu0
    %v2020 = vadd.f32 %v1867, %v2019
    %v2021 = vpop.f32.mrb[0].mxu0
    %2022 = vmatprep.mubr.f32.mxu0 0.0
    %2023 = vmatmul.mubr.f32.gmra.mrb[0].mxu0 %v1832
    %v2024 = vpop.f32.mrb[0].mxu0
    %v2025 = vadd.f32 %v1867, %v2024
    %v2026 = vpop.f32.mrb[0].mxu0
    %2027 = vmatprep.mubr.f32.mxu0 0.0
    %2028 = vmatmul.mubr.f32.gmra.mrb[0].mxu0 %v1833
    %v2029 = vpop.f32.mrb[0].mxu0
    %v2030 = vadd.f32 %v1867, %v2029
    %v2031 = vpop.f32.mrb[0].mxu0
    %2032 = vmatprep.mubr.f32.mxu0 0.0
    %2033 = vmatmul.mubr.f32.gmra.mrb[0].mxu0 %v1834
    %v2034 = vpop.f32.mrb[0].mxu0
    %v2035 = vadd.f32 %v1867, %v2034
    %v2036 = vpop.f32.mrb[0].mxu0
    %2037 = vmatprep.mubr.f32.mxu0 0.0
    %2038 = vmatmul.mubr.f32.gmra.mrb[0].mxu0 %v1835
    %v2039 = vpop.f32.mrb[0].mxu0
    %v2040 = vadd.f32 %v1867, %v2039
    %v2041 = vpop.f32.mrb[0].mxu0
    %2042 = vmatprep.mubr.f32.mxu0 0.0
    %2043 = vmatmul.mubr.f32.gmra.mrb[0].mxu0 %v1836
    %v2044 = vpop.f32.mrb[0].mxu0
    %v2045 = vadd.f32 %v1867, %v2044
    %v2046 = vpop.f32.mrb[0].mxu0
    %2047 = vmatprep.mubr.f32.mxu0 0.0
    %2048 = vmatmul.mubr.f32.gmra.mrb[0].mxu0 %v1837
    %v2049 = vpop.f32.mrb[0].mxu0
    %v2050 = vadd.f32 %v1867, %v2049
    %v2051 = vpop.f32.mrb[0].mxu0
    %2052 = vmatprep.mubr.f32.mxu0 0.0
    %2053 = vmatmul.mubr.f32.gmra.mrb[0].mxu0 %v1838
    %v2054 = vpop.f32.mrb[0].mxu0
    %v2055 = vadd.f32 %v1867, %v2054
    %v2056 = vpop.f32.mrb[0].mxu0
    %2057 = vmatprep.mubr.f32.mxu0 0.0
    %2058 = vmatmul.mubr.f32.gmra.mrb[0].mxu0 %v1839
    %v2059 = vpop.f32.mrb[0].mxu0
    %v2060 = vadd.f32 %v1867, %v2059
    %v2061 = vpop.f32.mrb[0].mxu0
    %2062 = vmatprep.mubr.f32.mxu0 0.0
    %2063 = vmatmul.mubr.f32.gmra.mrb[0].mxu0 %v1840
    %v2064 = vpop.f32.mrb[0].mxu0
    %v2065 = vadd.f32 %v1867, %v2064
    %v2066 = vpop.f32.mrb[0].mxu0
    %2067 = vmatprep.mubr.f32.mxu0 0.0
    %2068 = vmatmul.mubr.f32.gmra.mrb[0].mxu0 %v1841
    %v2069 = vpop.f32.mrb[0].mxu0
    %v2070 = vadd.f32 %v1867, %v2069
    %v2071 = vpop.f32.mrb[0].mxu0
    %2072 = vmatprep.mubr.f32.mxu0 0.0
    %2073 = vmatmul.mubr.f32.gmra.mrb[0].mxu0 %v1842
    %v2074 = vpop.f32.mrb[0].mxu0
    %v2075 = vadd.f32 %v1867, %v2074
    %v2076 = vpop.f32.mrb[0].mxu0
    %2077 = vmatprep.mubr.f32.mxu0 0.0
    %2078 = vmatmul.mubr.f32.gmra.mrb[0].mxu0 %v1843
    %v2079 = vpop.f32.mrb[0].mxu0
    %v2080 = vadd.f32 %v1867, %v2079
    %v2081 = vpop.f32.mrb[0].mxu0
    %2082 = vmatprep.mubr.f32.mxu0 0.0
    %2083 = vmatmul.mubr.f32.gmra.mrb[0].mxu0 %v1844
    %v2084 = vpop.f32.mrb[0].mxu0
    %v2085 = vadd.f32 %v1867, %v2084
    %v2086 = vpop.f32.mrb[0].mxu0
    %2087 = vmatprep.mubr.f32.mxu0 0.0
    %2088 = vmatmul.mubr.f32.gmra.mrb[0].mxu0 %v1845
    %v2089 = vpop.f32.mrb[0].mxu0
    %v2090 = vadd.f32 %v1867, %v2089
    %v2091 = vpop.f32.mrb[0].mxu0
    %2092 = vdwg.mxu0
    %v2093 = vld [vmem:[#allocation2 + $0x9] sm:$0x1]
    %v2094 = vld [vmem:[#allocation2 + $0xa] sm:$0x1]
    %2095 = vadd.xlane.f32.xlu0 %v1935
    %v2096 = vpop.xlane.xlu0 %2095
    %2097 = vadd.xlane.f32.xlu0 %v1940
    %v2098 = vpop.xlane.xlu0 %2097
    %2099 = vadd.xlane.f32.xlu0 %v1945
    %v2100 = vpop.xlane.xlu0 %2099
    %2101 = vadd.xlane.f32.xlu0 %v1950
    %v2102 = vpop.xlane.xlu0 %2101
    %2103 = vadd.xlane.f32.xlu0 %v1955
    %v2104 = vpop.xlane.xlu0 %2103
    %2105 = vadd.xlane.f32.xlu0 %v1960
    %v2106 = vpop.xlane.xlu0 %2105
    %2107 = vadd.xlane.f32.xlu0 %v1965
    %v2108 = vpop.xlane.xlu0 %2107
    %2109 = vadd.xlane.f32.xlu0 %v1970
    %v2110 = vpop.xlane.xlu0 %2109
    %2111 = vadd.xlane.f32.xlu0 %v1975
    %v2112 = vpop.xlane.xlu0 %2111
    %2113 = vadd.xlane.f32.xlu0 %v1980
    %v2114 = vpop.xlane.xlu0 %2113
    %2115 = vadd.xlane.f32.xlu0 %v1985
    %v2116 = vpop.xlane.xlu0 %2115
    %2117 = vadd.xlane.f32.xlu0 %v1990
    %v2118 = vpop.xlane.xlu0 %2117
    %2119 = vadd.xlane.f32.xlu0 %v1995
    %v2120 = vpop.xlane.xlu0 %2119
    %2121 = vadd.xlane.f32.xlu0 %v2000
    %v2122 = vpop.xlane.xlu0 %2121
    %2123 = vadd.xlane.f32.xlu0 %v2005
    %v2124 = vpop.xlane.xlu0 %2123
    %2125 = vadd.xlane.f32.xlu0 %v2010
    %v2126 = vpop.xlane.xlu0 %2125
    %2127 = vadd.xlane.f32.xlu0 %v2015
    %v2128 = vpop.xlane.xlu0 %2127
    %2129 = vadd.xlane.f32.xlu0 %v2020
    %v2130 = vpop.xlane.xlu0 %2129
    %2131 = vadd.xlane.f32.xlu0 %v2025
    %v2132 = vpop.xlane.xlu0 %2131
    %2133 = vadd.xlane.f32.xlu0 %v2030
    %v2134 = vpop.xlane.xlu0 %2133
    %2135 = vadd.xlane.f32.xlu0 %v2035
    %v2136 = vpop.xlane.xlu0 %2135
    %2137 = vadd.xlane.f32.xlu0 %v2040
    %v2138 = vpop.xlane.xlu0 %2137
    %2139 = vadd.xlane.f32.xlu0 %v2045
    %v2140 = vpop.xlane.xlu0 %2139
    %2141 = vadd.xlane.f32.xlu0 %v2050
    %v2142 = vpop.xlane.xlu0 %2141
    %2143 = vadd.xlane.f32.xlu0 %v2055
    %v2144 = vpop.xlane.xlu0 %2143
    %2145 = vadd.xlane.f32.xlu0 %v2060
    %v2146 = vpop.xlane.xlu0 %2145
    %2147 = vadd.xlane.f32.xlu0 %v2065
    %v2148 = vpop.xlane.xlu0 %2147
    %2149 = vadd.xlane.f32.xlu0 %v2070
    %v2150 = vpop.xlane.xlu0 %2149
    %2151 = vadd.xlane.f32.xlu0 %v2075
    %v2152 = vpop.xlane.xlu0 %2151
    %2153 = vadd.xlane.f32.xlu0 %v2080
    %v2154 = vpop.xlane.xlu0 %2153
    %2155 = vadd.xlane.f32.xlu0 %v2085
    %v2156 = vpop.xlane.xlu0 %2155
    %2157 = vadd.xlane.f32.xlu0 %v2090
    %v2158 = vpop.xlane.xlu0 %2157
    %v2159 = vmul.f32 %v2096, 0.03125
    %v2160 = vmul.f32 %v2098, 0.03125
    %v2161 = vmul.f32 %v2100, 0.03125
    %v2162 = vmul.f32 %v2102, 0.03125
    %v2163 = vmul.f32 %v2104, 0.03125
    %v2164 = vmul.f32 %v2106, 0.03125
    %v2165 = vmul.f32 %v2108, 0.03125
    %v2166 = vmul.f32 %v2110, 0.03125
    %v2167 = vmul.f32 %v2112, 0.03125
    %v2168 = vmul.f32 %v2114, 0.03125
    %v2169 = vmul.f32 %v2116, 0.03125
    %v2170 = vmul.f32 %v2118, 0.03125
    %v2171 = vmul.f32 %v2120, 0.03125
    %v2172 = vmul.f32 %v2122, 0.03125
    %v2173 = vmul.f32 %v2124, 0.03125
    %v2174 = vmul.f32 %v2126, 0.03125
    %v2175 = vmul.f32 %v2128, 0.03125
    %v2176 = vmul.f32 %v2130, 0.03125
    %v2177 = vmul.f32 %v2132, 0.03125
    %v2178 = vmul.f32 %v2134, 0.03125
    %v2179 = vmul.f32 %v2136, 0.03125
    %v2180 = vmul.f32 %v2138, 0.03125
    %v2181 = vmul.f32 %v2140, 0.03125
    %v2182 = vmul.f32 %v2142, 0.03125
    %v2183 = vmul.f32 %v2144, 0.03125
    %v2184 = vmul.f32 %v2146, 0.03125
    %v2185 = vmul.f32 %v2148, 0.03125
    %v2186 = vmul.f32 %v2150, 0.03125
    %v2187 = vmul.f32 %v2152, 0.03125
    %v2188 = vmul.f32 %v2154, 0.03125
    %v2189 = vmul.f32 %v2156, 0.03125
    %v2190 = vmul.f32 %v2158, 0.03125
    %v2191 = vmul.f32 %v1935, %v1935
    %v2192 = vmul.f32 %v1940, %v1940
    %v2193 = vmul.f32 %v1945, %v1945
    %v2194 = vmul.f32 %v1950, %v1950
    %v2195 = vmul.f32 %v1955, %v1955
    %v2196 = vmul.f32 %v1960, %v1960
    %v2197 = vmul.f32 %v1965, %v1965
    %v2198 = vmul.f32 %v1970, %v1970
    %v2199 = vmul.f32 %v1975, %v1975
    %v2200 = vmul.f32 %v1980, %v1980
    %v2201 = vmul.f32 %v1985, %v1985
    %v2202 = vmul.f32 %v1990, %v1990
    %v2203 = vmul.f32 %v1995, %v1995
    %v2204 = vmul.f32 %v2000, %v2000
    %v2205 = vmul.f32 %v2005, %v2005
    %v2206 = vmul.f32 %v2010, %v2010
    %v2207 = vmul.f32 %v2015, %v2015
    %v2208 = vmul.f32 %v2020, %v2020
    %v2209 = vmul.f32 %v2025, %v2025
    %v2210 = vmul.f32 %v2030, %v2030
    %v2211 = vmul.f32 %v2035, %v2035
    %v2212 = vmul.f32 %v2040, %v2040
    %v2213 = vmul.f32 %v2045, %v2045
    %v2214 = vmul.f32 %v2050, %v2050
    %v2215 = vmul.f32 %v2055, %v2055
    %v2216 = vmul.f32 %v2060, %v2060
    %v2217 = vmul.f32 %v2065, %v2065
    %v2218 = vmul.f32 %v2070, %v2070
    %v2219 = vmul.f32 %v2075, %v2075
    %v2220 = vmul.f32 %v2080, %v2080
    %v2221 = vmul.f32 %v2085, %v2085
    %v2222 = vmul.f32 %v2090, %v2090
    %2223 = vadd.xlane.f32.xlu0 %v2191
    %v2224 = vpop.xlane.xlu0 %2223
    %2225 = vadd.xlane.f32.xlu0 %v2192
    %v2226 = vpop.xlane.xlu0 %2225
    %2227 = vadd.xlane.f32.xlu0 %v2193
    %v2228 = vpop.xlane.xlu0 %2227
    %2229 = vadd.xlane.f32.xlu0 %v2194
    %v2230 = vpop.xlane.xlu0 %2229
    %2231 = vadd.xlane.f32.xlu0 %v2195
    %v2232 = vpop.xlane.xlu0 %2231
    %2233 = vadd.xlane.f32.xlu0 %v2196
    %v2234 = vpop.xlane.xlu0 %2233
    %2235 = vadd.xlane.f32.xlu0 %v2197
    %v2236 = vpop.xlane.xlu0 %2235
    %2237 = vadd.xlane.f32.xlu0 %v2198
    %v2238 = vpop.xlane.xlu0 %2237
    %2239 = vadd.xlane.f32.xlu0 %v2199
    %v2240 = vpop.xlane.xlu0 %2239
    %2241 = vadd.xlane.f32.xlu0 %v2200
    %v2242 = vpop.xlane.xlu0 %2241
    %2243 = vadd.xlane.f32.xlu0 %v2201
    %v2244 = vpop.xlane.xlu0 %2243
    %2245 = vadd.xlane.f32.xlu0 %v2202
    %v2246 = vpop.xlane.xlu0 %2245
    %2247 = vadd.xlane.f32.xlu0 %v2203
    %v2248 = vpop.xlane.xlu0 %2247
    %2249 = vadd.xlane.f32.xlu0 %v2204
    %v2250 = vpop.xlane.xlu0 %2249
    %2251 = vadd.xlane.f32.xlu0 %v2205
    %v2252 = vpop.xlane.xlu0 %2251
    %2253 = vadd.xlane.f32.xlu0 %v2206
    %v2254 = vpop.xlane.xlu0 %2253
    %2255 = vadd.xlane.f32.xlu0 %v2207
    %v2256 = vpop.xlane.xlu0 %2255
    %2257 = vadd.xlane.f32.xlu0 %v2208
    %v2258 = vpop.xlane.xlu0 %2257
    %2259 = vadd.xlane.f32.xlu0 %v2209
    %v2260 = vpop.xlane.xlu0 %2259
    %2261 = vadd.xlane.f32.xlu0 %v2210
    %v2262 = vpop.xlane.xlu0 %2261
    %2263 = vadd.xlane.f32.xlu0 %v2211
    %v2264 = vpop.xlane.xlu0 %2263
    %2265 = vadd.xlane.f32.xlu0 %v2212
    %v2266 = vpop.xlane.xlu0 %2265
    %2267 = vadd.xlane.f32.xlu0 %v2213
    %v2268 = vpop.xlane.xlu0 %2267
    %2269 = vadd.xlane.f32.xlu0 %v2214
    %v2270 = vpop.xlane.xlu0 %2269
    %2271 = vadd.xlane.f32.xlu0 %v2215
    %v2272 = vpop.xlane.xlu0 %2271
    %2273 = vadd.xlane.f32.xlu0 %v2216
    %v2274 = vpop.xlane.xlu0 %2273
    %2275 = vadd.xlane.f32.xlu0 %v2217
    %v2276 = vpop.xlane.xlu0 %2275
    %2277 = vadd.xlane.f32.xlu0 %v2218
    %v2278 = vpop.xlane.xlu0 %2277
    %2279 = vadd.xlane.f32.xlu0 %v2219
    %v2280 = vpop.xlane.xlu0 %2279
    %2281 = vadd.xlane.f32.xlu0 %v2220
    %v2282 = vpop.xlane.xlu0 %2281
    %2283 = vadd.xlane.f32.xlu0 %v2221
    %v2284 = vpop.xlane.xlu0 %2283
    %2285 = vadd.xlane.f32.xlu0 %v2222
    %v2286 = vpop.xlane.xlu0 %2285
    %v2287 = vmul.f32 %v2224, 0.03125
    %v2288 = vmul.f32 %v2226, 0.03125
    %v2289 = vmul.f32 %v2228, 0.03125
    %v2290 = vmul.f32 %v2230, 0.03125
    %v2291 = vmul.f32 %v2232, 0.03125
    %v2292 = vmul.f32 %v2234, 0.03125
    %v2293 = vmul.f32 %v2236, 0.03125
    %v2294 = vmul.f32 %v2238, 0.03125
    %v2295 = vmul.f32 %v2240, 0.03125
    %v2296 = vmul.f32 %v2242, 0.03125
    %v2297 = vmul.f32 %v2244, 0.03125
    %v2298 = vmul.f32 %v2246, 0.03125
    %v2299 = vmul.f32 %v2248, 0.03125
    %v2300 = vmul.f32 %v2250, 0.03125
    %v2301 = vmul.f32 %v2252, 0.03125
    %v2302 = vmul.f32 %v2254, 0.03125
    %v2303 = vmul.f32 %v2256, 0.03125
    %v2304 = vmul.f32 %v2258, 0.03125
    %v2305 = vmul.f32 %v2260, 0.03125
    %v2306 = vmul.f32 %v2262, 0.03125
    %v2307 = vmul.f32 %v2264, 0.03125
    %v2308 = vmul.f32 %v2266, 0.03125
    %v2309 = vmul.f32 %v2268, 0.03125
    %v2310 = vmul.f32 %v2270, 0.03125
    %v2311 = vmul.f32 %v2272, 0.03125
    %v2312 = vmul.f32 %v2274, 0.03125
    %v2313 = vmul.f32 %v2276, 0.03125
    %v2314 = vmul.f32 %v2278, 0.03125
    %v2315 = vmul.f32 %v2280, 0.03125
    %v2316 = vmul.f32 %v2282, 0.03125
    %v2317 = vmul.f32 %v2284, 0.03125
    %v2318 = vmul.f32 %v2286, 0.03125
    %v2319 = vmul.f32 %v2159, %v2159
    %v2320 = vmul.f32 %v2160, %v2160
    %v2321 = vmul.f32 %v2161, %v2161
    %v2322 = vmul.f32 %v2162, %v2162
    %v2323 = vmul.f32 %v2163, %v2163
    %v2324 = vmul.f32 %v2164, %v2164
    %v2325 = vmul.f32 %v2165, %v2165
    %v2326 = vmul.f32 %v2166, %v2166
    %v2327 = vmul.f32 %v2167, %v2167
    %v2328 = vmul.f32 %v2168, %v2168
    %v2329 = vmul.f32 %v2169, %v2169
    %v2330 = vmul.f32 %v2170, %v2170
    %v2331 = vmul.f32 %v2171, %v2171
    %v2332 = vmul.f32 %v2172, %v2172
    %v2333 = vmul.f32 %v2173, %v2173
    %v2334 = vmul.f32 %v2174, %v2174
    %v2335 = vmul.f32 %v2175, %v2175
    %v2336 = vmul.f32 %v2176, %v2176
    %v2337 = vmul.f32 %v2177, %v2177
    %v2338 = vmul.f32 %v2178, %v2178
    %v2339 = vmul.f32 %v2179, %v2179
    %v2340 = vmul.f32 %v2180, %v2180
    %v2341 = vmul.f32 %v2181, %v2181
    %v2342 = vmul.f32 %v2182, %v2182
    %v2343 = vmul.f32 %v2183, %v2183
    %v2344 = vmul.f32 %v2184, %v2184
    %v2345 = vmul.f32 %v2185, %v2185
    %v2346 = vmul.f32 %v2186, %v2186
    %v2347 = vmul.f32 %v2187, %v2187
    %v2348 = vmul.f32 %v2188, %v2188
    %v2349 = vmul.f32 %v2189, %v2189
    %v2350 = vmul.f32 %v2190, %v2190
    %v2351 = vsub.f32 %v2287, %v2319
    %v2352 = vsub.f32 %v2288, %v2320
    %v2353 = vsub.f32 %v2289, %v2321
    %v2354 = vsub.f32 %v2290, %v2322
    %v2355 = vsub.f32 %v2291, %v2323
    %v2356 = vsub.f32 %v2292, %v2324
    %v2357 = vsub.f32 %v2293, %v2325
    %v2358 = vsub.f32 %v2294, %v2326
    %v2359 = vsub.f32 %v2295, %v2327
    %v2360 = vsub.f32 %v2296, %v2328
    %v2361 = vsub.f32 %v2297, %v2329
    %v2362 = vsub.f32 %v2298, %v2330
    %v2363 = vsub.f32 %v2299, %v2331
    %v2364 = vsub.f32 %v2300, %v2332
    %v2365 = vsub.f32 %v2301, %v2333
    %v2366 = vsub.f32 %v2302, %v2334
    %v2367 = vsub.f32 %v2303, %v2335
    %v2368 = vsub.f32 %v2304, %v2336
    %v2369 = vsub.f32 %v2305, %v2337
    %v2370 = vsub.f32 %v2306, %v2338
    %v2371 = vsub.f32 %v2307, %v2339
    %v2372 = vsub.f32 %v2308, %v2340
    %v2373 = vsub.f32 %v2309, %v2341
    %v2374 = vsub.f32 %v2310, %v2342
    %v2375 = vsub.f32 %v2311, %v2343
    %v2376 = vsub.f32 %v2312, %v2344
    %v2377 = vsub.f32 %v2313, %v2345
    %v2378 = vsub.f32 %v2314, %v2346
    %v2379 = vsub.f32 %v2315, %v2347
    %v2380 = vsub.f32 %v2316, %v2348
    %v2381 = vsub.f32 %v2317, %v2349
    %v2382 = vsub.f32 %v2318, %v2350
    %v2383 = vmax.f32 %v2351, 0.0
    %v2384 = vmax.f32 %v2352, 0.0
    %v2385 = vmax.f32 %v2353, 0.0
    %v2386 = vmax.f32 %v2354, 0.0
    %v2387 = vmax.f32 %v2355, 0.0
    %v2388 = vmax.f32 %v2356, 0.0
    %v2389 = vmax.f32 %v2357, 0.0
    %v2390 = vmax.f32 %v2358, 0.0
    %v2391 = vmax.f32 %v2359, 0.0
    %v2392 = vmax.f32 %v2360, 0.0
    %v2393 = vmax.f32 %v2361, 0.0
    %v2394 = vmax.f32 %v2362, 0.0
    %v2395 = vmax.f32 %v2363, 0.0
    %v2396 = vmax.f32 %v2364, 0.0
    %v2397 = vmax.f32 %v2365, 0.0
    %v2398 = vmax.f32 %v2366, 0.0
    %v2399 = vmax.f32 %v2367, 0.0
    %v2400 = vmax.f32 %v2368, 0.0
    %v2401 = vmax.f32 %v2369, 0.0
    %v2402 = vmax.f32 %v2370, 0.0
    %v2403 = vmax.f32 %v2371, 0.0
    %v2404 = vmax.f32 %v2372, 0.0
    %v2405 = vmax.f32 %v2373, 0.0
    %v2406 = vmax.f32 %v2374, 0.0
    %v2407 = vmax.f32 %v2375, 0.0
    %v2408 = vmax.f32 %v2376, 0.0
    %v2409 = vmax.f32 %v2377, 0.0
    %v2410 = vmax.f32 %v2378, 0.0
    %v2411 = vmax.f32 %v2379, 0.0
    %v2412 = vmax.f32 %v2380, 0.0
    %v2413 = vmax.f32 %v2381, 0.0
    %v2414 = vmax.f32 %v2382, 0.0
    %v2415 = vsub.f32 %v1935, %v2159
    %v2416 = vsub.f32 %v1940, %v2160
    %v2417 = vsub.f32 %v1945, %v2161
    %v2418 = vsub.f32 %v1950, %v2162
    %v2419 = vsub.f32 %v1955, %v2163
    %v2420 = vsub.f32 %v1960, %v2164
    %v2421 = vsub.f32 %v1965, %v2165
    %v2422 = vsub.f32 %v1970, %v2166
    %v2423 = vsub.f32 %v1975, %v2167
    %v2424 = vsub.f32 %v1980, %v2168
    %v2425 = vsub.f32 %v1985, %v2169
    %v2426 = vsub.f32 %v1990, %v2170
    %v2427 = vsub.f32 %v1995, %v2171
    %v2428 = vsub.f32 %v2000, %v2172
    %v2429 = vsub.f32 %v2005, %v2173
    %v2430 = vsub.f32 %v2010, %v2174
    %v2431 = vsub.f32 %v2015, %v2175
    %v2432 = vsub.f32 %v2020, %v2176
    %v2433 = vsub.f32 %v2025, %v2177
    %v2434 = vsub.f32 %v2030, %v2178
    %v2435 = vsub.f32 %v2035, %v2179
    %v2436 = vsub.f32 %v2040, %v2180
    %v2437 = vsub.f32 %v2045, %v2181
    %v2438 = vsub.f32 %v2050, %v2182
    %v2439 = vsub.f32 %v2055, %v2183
    %v2440 = vsub.f32 %v2060, %v2184
    %v2441 = vsub.f32 %v2065, %v2185
    %v2442 = vsub.f32 %v2070, %v2186
    %v2443 = vsub.f32 %v2075, %v2187
    %v2444 = vsub.f32 %v2080, %v2188
    %v2445 = vsub.f32 %v2085, %v2189
    %v2446 = vsub.f32 %v2090, %v2190
    %v2447 = vadd.f32 %v2383, 1e-05
    %v2448 = vadd.f32 %v2384, 1e-05
    %v2449 = vadd.f32 %v2385, 1e-05
    %v2450 = vadd.f32 %v2386, 1e-05
    %v2451 = vadd.f32 %v2387, 1e-05
    %v2452 = vadd.f32 %v2388, 1e-05
    %v2453 = vadd.f32 %v2389, 1e-05
    %v2454 = vadd.f32 %v2390, 1e-05
    %v2455 = vadd.f32 %v2391, 1e-05
    %v2456 = vadd.f32 %v2392, 1e-05
    %v2457 = vadd.f32 %v2393, 1e-05
    %v2458 = vadd.f32 %v2394, 1e-05
    %v2459 = vadd.f32 %v2395, 1e-05
    %v2460 = vadd.f32 %v2396, 1e-05
    %v2461 = vadd.f32 %v2397, 1e-05
    %v2462 = vadd.f32 %v2398, 1e-05
    %v2463 = vadd.f32 %v2399, 1e-05
    %v2464 = vadd.f32 %v2400, 1e-05
    %v2465 = vadd.f32 %v2401, 1e-05
    %v2466 = vadd.f32 %v2402, 1e-05
    %v2467 = vadd.f32 %v2403, 1e-05
    %v2468 = vadd.f32 %v2404, 1e-05
    %v2469 = vadd.f32 %v2405, 1e-05
    %v2470 = vadd.f32 %v2406, 1e-05
    %v2471 = vadd.f32 %v2407, 1e-05
    %v2472 = vadd.f32 %v2408, 1e-05
    %v2473 = vadd.f32 %v2409, 1e-05
    %v2474 = vadd.f32 %v2410, 1e-05
    %v2475 = vadd.f32 %v2411, 1e-05
    %v2476 = vadd.f32 %v2412, 1e-05
    %v2477 = vadd.f32 %v2413, 1e-05
    %v2478 = vadd.f32 %v2414, 1e-05
    %v2479 = vrsqrt.pop %v2447
    %v2480 = vrsqrt.pop %v2448
    %v2481 = vrsqrt.pop %v2449
    %v2482 = vrsqrt.pop %v2450
    %v2483 = vrsqrt.pop %v2451
    %v2484 = vrsqrt.pop %v2452
    %v2485 = vrsqrt.pop %v2453
    %v2486 = vrsqrt.pop %v2454
    %v2487 = vrsqrt.pop %v2455
    %v2488 = vrsqrt.pop %v2456
    %v2489 = vrsqrt.pop %v2457
    %v2490 = vrsqrt.pop %v2458
    %v2491 = vrsqrt.pop %v2459
    %v2492 = vrsqrt.pop %v2460
    %v2493 = vrsqrt.pop %v2461
    %v2494 = vrsqrt.pop %v2462
    %v2495 = vrsqrt.pop %v2463
    %v2496 = vrsqrt.pop %v2464
    %v2497 = vrsqrt.pop %v2465
    %v2498 = vrsqrt.pop %v2466
    %v2499 = vrsqrt.pop %v2467
    %v2500 = vrsqrt.pop %v2468
    %v2501 = vrsqrt.pop %v2469
    %v2502 = vrsqrt.pop %v2470
    %v2503 = vrsqrt.pop %v2471
    %v2504 = vrsqrt.pop %v2472
    %v2505 = vrsqrt.pop %v2473
    %v2506 = vrsqrt.pop %v2474
    %v2507 = vrsqrt.pop %v2475
    %v2508 = vrsqrt.pop %v2476
    %v2509 = vrsqrt.pop %v2477
    %v2510 = vrsqrt.pop %v2478
    %v2511 = vmul.f32 %v2415, %v2479
    %v2512 = vmul.f32 %v2416, %v2480
    %v2513 = vmul.f32 %v2417, %v2481
    %v2514 = vmul.f32 %v2418, %v2482
    %v2515 = vmul.f32 %v2419, %v2483
    %v2516 = vmul.f32 %v2420, %v2484
    %v2517 = vmul.f32 %v2421, %v2485
    %v2518 = vmul.f32 %v2422, %v2486
    %v2519 = vmul.f32 %v2423, %v2487
    %v2520 = vmul.f32 %v2424, %v2488
    %v2521 = vmul.f32 %v2425, %v2489
    %v2522 = vmul.f32 %v2426, %v2490
    %v2523 = vmul.f32 %v2427, %v2491
    %v2524 = vmul.f32 %v2428, %v2492
    %v2525 = vmul.f32 %v2429, %v2493
    %v2526 = vmul.f32 %v2430, %v2494
    %v2527 = vmul.f32 %v2431, %v2495
    %v2528 = vmul.f32 %v2432, %v2496
    %v2529 = vmul.f32 %v2433, %v2497
    %v2530 = vmul.f32 %v2434, %v2498
    %v2531 = vmul.f32 %v2435, %v2499
    %v2532 = vmul.f32 %v2436, %v2500
    %v2533 = vmul.f32 %v2437, %v2501
    %v2534 = vmul.f32 %v2438, %v2502
    %v2535 = vmul.f32 %v2439, %v2503
    %v2536 = vmul.f32 %v2440, %v2504
    %v2537 = vmul.f32 %v2441, %v2505
    %v2538 = vmul.f32 %v2442, %v2506
    %v2539 = vmul.f32 %v2443, %v2507
    %v2540 = vmul.f32 %v2444, %v2508
    %v2541 = vmul.f32 %v2445, %v2509
    %v2542 = vmul.f32 %v2446, %v2510
    %v2543 = vlaneseq
    %v2544 = vshrl.u32 %v2543, 7
    %v2545 = vsub.s32 0, %v2544
    %v2546 = vrot.slane %v2093, %v2545
    %v2547 = vmul.f32 %v2511, %v2546
    %v2548 = vmul.f32 %v2512, %v2546
    %v2549 = vmul.f32 %v2513, %v2546
    %v2550 = vmul.f32 %v2514, %v2546
    %v2551 = vmul.f32 %v2515, %v2546
    %v2552 = vmul.f32 %v2516, %v2546
    %v2553 = vmul.f32 %v2517, %v2546
    %v2554 = vmul.f32 %v2518, %v2546
    %v2555 = vmul.f32 %v2519, %v2546
    %v2556 = vmul.f32 %v2520, %v2546
    %v2557 = vmul.f32 %v2521, %v2546
    %v2558 = vmul.f32 %v2522, %v2546
    %v2559 = vmul.f32 %v2523, %v2546
    %v2560 = vmul.f32 %v2524, %v2546
    %v2561 = vmul.f32 %v2525, %v2546
    %v2562 = vmul.f32 %v2526, %v2546
    %v2563 = vmul.f32 %v2527, %v2546
    %v2564 = vmul.f32 %v2528, %v2546
    %v2565 = vmul.f32 %v2529, %v2546
    %v2566 = vmul.f32 %v2530, %v2546
    %v2567 = vmul.f32 %v2531, %v2546
    %v2568 = vmul.f32 %v2532, %v2546
    %v2569 = vmul.f32 %v2533, %v2546
    %v2570 = vmul.f32 %v2534, %v2546
    %v2571 = vmul.f32 %v2535, %v2546
    %v2572 = vmul.f32 %v2536, %v2546
    %v2573 = vmul.f32 %v2537, %v2546
    %v2574 = vmul.f32 %v2538, %v2546
    %v2575 = vmul.f32 %v2539, %v2546
    %v2576 = vmul.f32 %v2540, %v2546
    %v2577 = vmul.f32 %v2541, %v2546
    %v2578 = vmul.f32 %v2542, %v2546
    %v2579 = vlaneseq
    %v2580 = vshrl.u32 %v2579, 7
    %v2581 = vsub.s32 0, %v2580
    %v2582 = vrot.slane %v2094, %v2581
    %v2583 = vadd.f32 %v2547, %v2582
    %v2584 = vadd.f32 %v2548, %v2582
    %v2585 = vadd.f32 %v2549, %v2582
    %v2586 = vadd.f32 %v2550, %v2582
    %v2587 = vadd.f32 %v2551, %v2582
    %v2588 = vadd.f32 %v2552, %v2582
    %v2589 = vadd.f32 %v2553, %v2582
    %v2590 = vadd.f32 %v2554, %v2582
    %v2591 = vadd.f32 %v2555, %v2582
    %v2592 = vadd.f32 %v2556, %v2582
    %v2593 = vadd.f32 %v2557, %v2582
    %v2594 = vadd.f32 %v2558, %v2582
    %v2595 = vadd.f32 %v2559, %v2582
    %v2596 = vadd.f32 %v2560, %v2582
    %v2597 = vadd.f32 %v2561, %v2582
    %v2598 = vadd.f32 %v2562, %v2582
    %v2599 = vadd.f32 %v2563, %v2582
    %v2600 = vadd.f32 %v2564, %v2582
    %v2601 = vadd.f32 %v2565, %v2582
    %v2602 = vadd.f32 %v2566, %v2582
    %v2603 = vadd.f32 %v2567, %v2582
    %v2604 = vadd.f32 %v2568, %v2582
    %v2605 = vadd.f32 %v2569, %v2582
    %v2606 = vadd.f32 %v2570, %v2582
    %v2607 = vadd.f32 %v2571, %v2582
    %v2608 = vadd.f32 %v2572, %v2582
    %v2609 = vadd.f32 %v2573, %v2582
    %v2610 = vadd.f32 %v2574, %v2582
    %v2611 = vadd.f32 %v2575, %v2582
    %v2612 = vadd.f32 %v2576, %v2582
    %v2613 = vadd.f32 %v2577, %v2582
    %v2614 = vadd.f32 %v2578, %v2582
    %v2615 = vmax.f32 %v2583, 0.0
    %v2616 = vmax.f32 %v2584, 0.0
    %v2617 = vmax.f32 %v2585, 0.0
    %v2618 = vmax.f32 %v2586, 0.0
    %v2619 = vmax.f32 %v2587, 0.0
    %v2620 = vmax.f32 %v2588, 0.0
    %v2621 = vmax.f32 %v2589, 0.0
    %v2622 = vmax.f32 %v2590, 0.0
    %v2623 = vmax.f32 %v2591, 0.0
    %v2624 = vmax.f32 %v2592, 0.0
    %v2625 = vmax.f32 %v2593, 0.0
    %v2626 = vmax.f32 %v2594, 0.0
    %v2627 = vmax.f32 %v2595, 0.0
    %v2628 = vmax.f32 %v2596, 0.0
    %v2629 = vmax.f32 %v2597, 0.0
    %v2630 = vmax.f32 %v2598, 0.0
    %v2631 = vmax.f32 %v2599, 0.0
    %v2632 = vmax.f32 %v2600, 0.0
    %v2633 = vmax.f32 %v2601, 0.0
    %v2634 = vmax.f32 %v2602, 0.0
    %v2635 = vmax.f32 %v2603, 0.0
    %v2636 = vmax.f32 %v2604, 0.0
    %v2637 = vmax.f32 %v2605, 0.0
    %v2638 = vmax.f32 %v2606, 0.0
    %v2639 = vmax.f32 %v2607, 0.0
    %v2640 = vmax.f32 %v2608, 0.0
    %v2641 = vmax.f32 %v2609, 0.0
    %v2642 = vmax.f32 %v2610, 0.0
    %v2643 = vmax.f32 %v2611, 0.0
    %v2644 = vmax.f32 %v2612, 0.0
    %v2645 = vmax.f32 %v2613, 0.0
    %v2646 = vmax.f32 %v2614, 0.0
    %v2647 = vld [vmem:[#allocation2 + $0x10] sm:$0xff]
    %v2648 = vld [vmem:[#allocation2 + $0xb] sm:$0x1]
    %2649 = vmatprep.subr.mxu0 0.0
    %2650 = vmatpush1.xpose.msra.mxu0 %v2615
    %2651 = vmatprep.subr.mxu0 0.0
    %2652 = vmatpush1.xpose.msra.mxu0 %v2616
    %2653 = vmatprep.subr.mxu0 0.0
    %2654 = vmatpush1.xpose.msra.mxu0 %v2617
    %2655 = vmatprep.subr.mxu0 0.0
    %2656 = vmatpush1.xpose.msra.mxu0 %v2618
    %2657 = vmatprep.subr.mxu0 0.0
    %2658 = vmatpush1.xpose.msra.mxu0 %v2619
    %2659 = vmatprep.subr.mxu0 0.0
    %2660 = vmatpush1.xpose.msra.mxu0 %v2620
    %2661 = vmatprep.subr.mxu0 0.0
    %2662 = vmatpush1.xpose.msra.mxu0 %v2621
    %2663 = vmatprep.subr.mxu0 0.0
    %2664 = vmatpush1.xpose.msra.mxu0 %v2622
    %2665 = vmatprep.subr.mxu0 0.0
    %2666 = vmatpush1.xpose.msra.mxu0 %v2623
    %2667 = vmatprep.subr.mxu0 0.0
    %2668 = vmatpush1.xpose.msra.mxu0 %v2624
    %2669 = vmatprep.subr.mxu0 0.0
    %2670 = vmatpush1.xpose.msra.mxu0 %v2625
    %2671 = vmatprep.subr.mxu0 0.0
    %2672 = vmatpush1.xpose.msra.mxu0 %v2626
    %2673 = vmatprep.subr.mxu0 0.0
    %2674 = vmatpush1.xpose.msra.mxu0 %v2627
    %2675 = vmatprep.subr.mxu0 0.0
    %2676 = vmatpush1.xpose.msra.mxu0 %v2628
    %2677 = vmatprep.subr.mxu0 0.0
    %2678 = vmatpush1.xpose.msra.mxu0 %v2629
    %2679 = vmatprep.subr.mxu0 0.0
    %2680 = vmatpush1.xpose.msra.mxu0 %v2630
    %2681 = vmatprep.subr.mxu0 0.0
    %2682 = vmatpush1.xpose.msra.mxu0 0.0
    %2683 = vmatprep.subr.mxu0 0.0
    %2684 = vmatpush1.xpose.msra.mxu0 0.0
    %2685 = vmatprep.subr.mxu0 0.0
    %2686 = vmatpush1.xpose.msra.mxu0 0.0
    %2687 = vmatprep.subr.mxu0 0.0
    %2688 = vmatpush1.xpose.msra.mxu0 0.0
    %2689 = vmatprep.subr.mxu0 0.0
    %2690 = vmatpush1.xpose.msra.mxu0 0.0
    %2691 = vmatprep.subr.mxu0 0.0
    %2692 = vmatpush1.xpose.msra.mxu0 0.0
    %2693 = vmatprep.subr.mxu0 0.0
    %2694 = vmatpush1.xpose.msra.mxu0 0.0
    %2695 = vmatprep.subr.mxu0 0.0
    %2696 = vmatpush1.xpose.msra.mxu0 0.0
    %2697 = vmatprep.subr.mxu0 0.0
    %2698 = vmatpush1.xpose.msra.mxu0 0.0
    %2699 = vmatprep.subr.mxu0 0.0
    %2700 = vmatpush1.xpose.msra.mxu0 0.0
    %2701 = vmatprep.subr.mxu0 0.0
    %2702 = vmatpush1.xpose.msra.mxu0 0.0
    %2703 = vmatprep.subr.mxu0 0.0
    %2704 = vmatpush1.xpose.msra.mxu0 0.0
    %2705 = vmatprep.subr.mxu0 0.0
    %2706 = vmatpush1.xpose.msra.mxu0 0.0
    %2707 = vmatprep.subr.mxu0 0.0
    %2708 = vmatpush1.xpose.msra.mxu0 0.0
    %2709 = vmatprep.subr.mxu0 0.0
    %2710 = vmatpush1.xpose.msra.mxu0 0.0
    %2711 = vmatprep.subr.mxu0 0.0
    %2712 = vmatpush1.xpose.msra.mxu0 0.0
    %2713 = vmatprep.mubr.f32.mxu0 0.0
    %2714 = vmatmul.mubr.f32.gmra.mrb[0].mxu0 %v2647
    %v2715 = vpop.f32.mrb[0].mxu0
    %v2716 = vadd.f32 0.0, %v2715
    %v2717 = vpop.f32.mrb[0].mxu0
    %2718 = vdwg.mxu0
    %2720 = vset.pattern.permute.xlu0 0
    %2721 = vperm.xlu0 %2720, %v2648
    %v2722 = vpop.permute.xlu0 %2721
    %v2724 = vadd.f32 %v2716, %v2722
    %2725 = vst [vmem:[#allocation5] sm:$0x1] %v2724
    %2726 = vmatprep.subr.mxu0 0.0
    %2727 = vmatpush1.xpose.msra.mxu0 %v2631
    %2728 = vmatprep.subr.mxu0 0.0
    %2729 = vmatpush1.xpose.msra.mxu0 %v2632
    %2730 = vmatprep.subr.mxu0 0.0
    %2731 = vmatpush1.xpose.msra.mxu0 %v2633
    %2732 = vmatprep.subr.mxu0 0.0
    %2733 = vmatpush1.xpose.msra.mxu0 %v2634
    %2734 = vmatprep.subr.mxu0 0.0
    %2735 = vmatpush1.xpose.msra.mxu0 %v2635
    %2736 = vmatprep.subr.mxu0 0.0
    %2737 = vmatpush1.xpose.msra.mxu0 %v2636
    %2738 = vmatprep.subr.mxu0 0.0
    %2739 = vmatpush1.xpose.msra.mxu0 %v2637
    %2740 = vmatprep.subr.mxu0 0.0
    %2741 = vmatpush1.xpose.msra.mxu0 %v2638
    %2742 = vmatprep.subr.mxu0 0.0
    %2743 = vmatpush1.xpose.msra.mxu0 %v2639
    %2744 = vmatprep.subr.mxu0 0.0
    %2745 = vmatpush1.xpose.msra.mxu0 %v2640
    %2746 = vmatprep.subr.mxu0 0.0
    %2747 = vmatpush1.xpose.msra.mxu0 %v2641
    %2748 = vmatprep.subr.mxu0 0.0
    %2749 = vmatpush1.xpose.msra.mxu0 %v2642
    %2750 = vmatprep.subr.mxu0 0.0
    %2751 = vmatpush1.xpose.msra.mxu0 %v2643
    %2752 = vmatprep.subr.mxu0 0.0
    %2753 = vmatpush1.xpose.msra.mxu0 %v2644
    %2754 = vmatprep.subr.mxu0 0.0
    %2755 = vmatpush1.xpose.msra.mxu0 %v2645
    %2756 = vmatprep.subr.mxu0 0.0
    %2757 = vmatpush1.xpose.msra.mxu0 %v2646
    %2758 = vmatprep.subr.mxu0 0.0
    %2759 = vmatpush1.xpose.msra.mxu0 0.0
    %2760 = vmatprep.subr.mxu0 0.0
    %2761 = vmatpush1.xpose.msra.mxu0 0.0
    %2762 = vmatprep.subr.mxu0 0.0
    %2763 = vmatpush1.xpose.msra.mxu0 0.0
    %2764 = vmatprep.subr.mxu0 0.0
    %2765 = vmatpush1.xpose.msra.mxu0 0.0
    %2766 = vmatprep.subr.mxu0 0.0
    %2767 = vmatpush1.xpose.msra.mxu0 0.0
    %2768 = vmatprep.subr.mxu0 0.0
    %2769 = vmatpush1.xpose.msra.mxu0 0.0
    %2770 = vmatprep.subr.mxu0 0.0
    %2771 = vmatpush1.xpose.msra.mxu0 0.0
    %2772 = vmatprep.subr.mxu0 0.0
    %2773 = vmatpush1.xpose.msra.mxu0 0.0
    %2774 = vmatprep.subr.mxu0 0.0
    %2775 = vmatpush1.xpose.msra.mxu0 0.0
    %2776 = vmatprep.subr.mxu0 0.0
    %2777 = vmatpush1.xpose.msra.mxu0 0.0
    %2778 = vmatprep.subr.mxu0 0.0
    %2779 = vmatpush1.xpose.msra.mxu0 0.0
    %2780 = vmatprep.subr.mxu0 0.0
    %2781 = vmatpush1.xpose.msra.mxu0 0.0
    %2782 = vmatprep.subr.mxu0 0.0
    %2783 = vmatpush1.xpose.msra.mxu0 0.0
    %2784 = vmatprep.subr.mxu0 0.0
    %2785 = vmatpush1.xpose.msra.mxu0 0.0
    %2786 = vmatprep.subr.mxu0 0.0
    %2787 = vmatpush1.xpose.msra.mxu0 0.0
    %2788 = vmatprep.subr.mxu0 0.0
    %2789 = vmatpush1.xpose.msra.mxu0 0.0
    %2790 = vmatprep.mubr.f32.mxu0 0.0
    %2791 = vmatmul.mubr.f32.gmra.mrb[0].mxu0 %v2647
    %v2792 = vpop.f32.mrb[0].mxu0
    %v2793 = vadd.f32 0.0, %v2792
    %v2794 = vpop.f32.mrb[0].mxu0
    %2795 = vdwg.mxu0
    %v2796 = vadd.f32 %v2793, %v2722
    %2797 = vst [vmem:[#allocation5 + $0x1] sm:$0x1] %v2796
    // Predicated region
    $region18: #{tpu_custom_call.1} parent=1 // pred_check
      _
    $region19: #{tpu_custom_call.1} parent=1 // pred_check_branch
      %2799 = sbr.rel (0) target = $region21
    $region20: #{tpu_custom_call.1} parent=1 // pred_region
      %s2801 = ssub.s32 32, 32
      %2802 = vsyncadd [#allocation4], %s2801
      %s2804 = sshll.u32 [#allocation5], 4
      %s2805 = int_to_ptr.vmem [resolvable:$true] %s2804
      %2807 = dma.vmem_to_hbm [thread:$0]  %s2805, 32, %s3, [#allocation4]
    $region21: #{tpu_custom_call.1} parent=1 // pred_fallthru
      _
    // Predicated region
    $region22: #{tpu_custom_call.1} parent=1 // pred_check
      _
    $region23: #{tpu_custom_call.1} parent=1 // pred_check_branch
      %2809 = sbr.rel (0) target = $region25
    $region24: #{tpu_custom_call.1} parent=1 // pred_region
      %2810 = dma.done [#allocation4], 32
    $region25: #{tpu_custom_call.1} parent=1 // pred_fallthru
      _
    %2811 = vsyncpa [#allocation3], 1
    %2812 = vsyncpa [#allocation4], 1

</llo_original>
